<compile_context>
chip_gen: v7x
topology: tpu7x:2x2x1
jax: 0.10.0
libtpu: 0.0.40
codegen_flags: <defaults>
</compile_context>

<pallas_src>
import functools
import numpy as np
import jax
import jax.numpy as jnp
from jax import lax
from jax.experimental import pallas as pl
from jax.experimental.pallas import tpu as pltpu

EPS = 1e-5


def _round_up(x, m):
    return (x + m - 1) // m * m


def _vmem_budget_bytes():
    """Scoped-VMEM limit to request + the tile-sizing budget derived from it.

    v5e/v6e have 128 MiB physical VMEM (16/32 MiB default scoped limit); v7x has 64 MiB.
    We raise the scoped limit explicitly and size tiles against ~half of it so the same
    code fits every generation with double-buffering headroom.
    """
    try:
        cap = int(pltpu.get_tpu_info().vmem_capacity_bytes)
    except Exception:
        cap = 64 * 1024 * 1024          # conservative (v7x) fallback
    limit = min(cap * 3 // 4, 96 * 1024 * 1024)
    return limit, limit // 2


def _choose_conv_tile_h(H, W, C, d, budget):
    """Largest row tile (multiple of 8, divides H, multiple of d) whose working set fits."""
    cpad = _round_up(C, 128)            # conservative: minor dims pad to a full lane group
    c9pad = _round_up(9 * C, 128)

    def est(th):
        body = th * W * cpad * 4 * 2                    # body input block, double buffered
        halo = 2 * (d * W * cpad * 4) * 2               # two halo blocks, double buffered
        yout = th * W * cpad * 4 * 2                    # raw conv output block
        win = (th + 2 * d) * (W + 2 * d) * cpad * 4     # padded window scratch
        patch = th * W * c9pad * 4                      # im2col patch (largest intermediate)
        acc = th * W * cpad * 4 * 2                     # matmul result + temporaries
        wfat = 9 * C * cpad * 4 * 2
        return body + halo + yout + win + patch + acc + wfat

    best = None
    th = 8
    while th <= H:
        if H % th == 0 and th % d == 0 and est(th) <= budget:
            best = th
        th += 8
    return best if best is not None else 8


def _choose_fin_tile_h(H, WC, budget):
    def est(th):
        return 3 * th * WC * 4 * 2 + 2 * WC * 4 * 2
    best = 8
    th = 8
    while th <= H:
        if H % th == 0 and est(th) <= budget:
            best = th
        th += 8
    return best


# ---------------------------------------------------------------------------
# Kernel 1/2: dilated 3x3 quaternion conv (+ optional fused affine+ReLU pre-activation)
#             + per-tile channel moments for the instance norm.
# ---------------------------------------------------------------------------
def _conv_kernel(x_top_ref, x_body_ref, x_bot_ref, w_ref, scale_ref, shift_ref,
                 y_ref, stats_ref, win_ref, *, TH, W, C, d, pre_act):
    t = pl.program_id(1)

    def pre(v):
        if pre_act:
            # Fused QuaternionInstanceNorm + ReLU of the previous stage: relu(v*scale + shift).
            return jnp.maximum(v * scale_ref[...] + shift_ref[...], 0.0)
        return v

    # Zero the d-wide W borders of the padded window scratch.  Done every step (cheap, border
    # only) so the scratch needs no cross-step init, which would not be megacore-safe.
    win_ref[:, 0:d, :] = jnp.zeros((TH + 2 * d, d, C), jnp.float32)
    win_ref[:, d + W:d + W + d, :] = jnp.zeros((TH + 2 * d, d, C), jnp.float32)

    # Halo + body rows written straight into the window interior (no concatenates),
    # with the previous stage's norm affine + ReLU fused in.
    win_ref[0:d, d:d + W, :] = pre(x_top_ref[0])
    win_ref[d:d + TH, d:d + W, :] = pre(x_body_ref[0])
    win_ref[d + TH:d + TH + d, d:d + W, :] = pre(x_bot_ref[0])

    # The conv zero-pads the *activation* in H: only the first / last row tile has out-of-image
    # halo rows, so the masking is gated instead of a full-window iota/compare/select.
    @pl.when(t == 0)
    def _():
        win_ref[0:d, :, :] = jnp.zeros((d, W + 2 * d, C), jnp.float32)

    @pl.when(t == pl.num_programs(1) - 1)
    def _():
        win_ref[d + TH:d + TH + d, :, :] = jnp.zeros((d, W + 2 * d, C), jnp.float32)

    # im2col: 9 shifted taps concatenated along channels -> one fat MXU matmul.
    taps = []
    for kh in range(3):
        for kw in range(3):
            taps.append(win_ref[kh * d:kh * d + TH, kw * d:kw * d + W, :]
                        .reshape(TH * W, C))
    patch = jnp.concatenate(taps, axis=-1)                    # (TH*W, 9C)
    acc = jnp.dot(patch, w_ref[...], preferred_element_type=jnp.float32)  # (TH*W, C)

    y_ref[...] = acc[None]                                    # raw conv output for this tile

    # Per-tile, per-channel first / second moments (folded into the norm affine in JAX).
    s1 = jnp.sum(acc, axis=0, keepdims=True)                  # (1, C)
    s2 = jnp.sum(acc * acc, axis=0, keepdims=True)            # (1, C)
    stats_ref[...] = jnp.concatenate([s1, s2], axis=0)[None, None]  # (1, 1, 2, C)


def _conv_stage(x_bhwc, w_fat, scale_c, shift_c, *, dil, tile_h, vmem_limit, pre_act):
    B, H, W, C = x_bhwc.shape
    TH, d = tile_h, dil
    nT = H // TH
    thd = TH // d
    nhd = H // d

    if scale_c is None:
        scale = jnp.ones((1, 1, C), jnp.float32)
        shift = jnp.zeros((B, 1, C), jnp.float32)
    else:
        scale = scale_c.reshape(1, 1, C)
        shift = shift_c.reshape(B, 1, C)

    kernel = functools.partial(_conv_kernel, TH=TH, W=W, C=C, d=d, pre_act=pre_act)

    y, stats = pl.pallas_call(
        kernel,
        out_shape=(jax.ShapeDtypeStruct((B, H * W, C), jnp.float32),
                   jax.ShapeDtypeStruct((B, nT, 2, C), jnp.float32)),
        grid=(B, nT),
        in_specs=[
            # top halo rows [t*TH - d, t*TH), clamped into the image at t == 0 (zeroed in-kernel)
            pl.BlockSpec((1, d, W, C),
                         lambda b, t: (b, jnp.maximum(t * thd - 1, 0), 0, 0)),
            # body rows [t*TH, t*TH + TH)
            pl.BlockSpec((1, TH, W, C), lambda b, t: (b, t, 0, 0)),
            # bottom halo rows [t*TH + TH, +d), clamped at the last tile (zeroed in-kernel)
            pl.BlockSpec((1, d, W, C),
                         lambda b, t: (b, jnp.minimum((t + 1) * thd, nhd - 1), 0, 0)),
            pl.BlockSpec((9 * C, C), lambda b, t: (0, 0)),          # fat conv weights
            pl.BlockSpec((1, 1, C), lambda b, t: (0, 0, 0)),        # pre-act scale
            pl.BlockSpec((1, 1, C), lambda b, t: (b, 0, 0)),        # pre-act shift (per sample)
        ],
        out_specs=(
            pl.BlockSpec((1, TH * W, C), lambda b, t: (b, t, 0)),
            pl.BlockSpec((1, 1, 2, C), lambda b, t: (b, t, 0, 0)),
        ),
        scratch_shapes=[pltpu.VMEM((TH + 2 * d, W + 2 * d, C), jnp.float32)],
        compiler_params=pltpu.CompilerParams(
            dimension_semantics=("parallel", "parallel"),
            vmem_limit_bytes=vmem_limit),
    )(x_bhwc, x_bhwc, x_bhwc, w_fat, scale, shift)
    return y, stats


# ---------------------------------------------------------------------------
# Kernel 3: out = relu(residual + y*scale + shift)  — lane-dense (B, H, W*C) layout.
# ---------------------------------------------------------------------------
def _finalize_kernel(y_ref, res_ref, scale_ref, shift_ref, out_ref):
    out_ref[...] = jnp.maximum(
        res_ref[...] + y_ref[...] * scale_ref[...] + shift_ref[...], 0.0)


def _finalize(y_flat, x_bhwc, scale_c, shift_c, *, tile_h, vmem_limit):
    B, H, W, C = x_bhwc.shape
    WC = W * C
    nT = H // tile_h
    y2 = y_flat.reshape(B, H, WC)
    xr = x_bhwc.reshape(B, H, WC)
    scale_wc = jnp.tile(scale_c, W).reshape(1, 1, WC)
    shift_wc = jnp.tile(shift_c, (1, W)).reshape(B, 1, WC)

    out = pl.pallas_call(
        _finalize_kernel,
        out_shape=jax.ShapeDtypeStruct((B, H, WC), jnp.float32),
        grid=(B, nT),
        in_specs=[
            pl.BlockSpec((1, tile_h, WC), lambda b, t: (b, t, 0)),
            pl.BlockSpec((1, tile_h, WC), lambda b, t: (b, t, 0)),
            pl.BlockSpec((1, 1, WC), lambda b, t: (0, 0, 0)),
            pl.BlockSpec((1, 1, WC), lambda b, t: (b, 0, 0)),
        ],
        out_specs=pl.BlockSpec((1, tile_h, WC), lambda b, t: (b, t, 0)),
        compiler_params=pltpu.CompilerParams(
            dimension_semantics=("parallel", "parallel"),
            vmem_limit_bytes=vmem_limit),
    )(y2, xr, scale_wc, shift_wc)
    return out.reshape(B, H, W, C)


# ---------------------------------------------------------------------------
# Quaternion instance norm -> per-channel affine (scale, shift), from the per-tile moments.
# Note: sum-of-squares minus n*mean^2 in f32 — fine at these sizes; switch to a centered
# two-pass reduction if activations/resolutions get large.
# ---------------------------------------------------------------------------
def _norm_affine(stats, gamma, beta, H, W, C):
    B = stats.shape[0]
    C4 = C // 4
    sums = jnp.sum(stats[:, :, 0, :], axis=1)                 # (B, C)
    sqs = jnp.sum(stats[:, :, 1, :], axis=1)                  # (B, C)
    comp_sum = sums.reshape(B, 4, C4).sum(axis=2)             # (B, 4)
    comp_sq = sqs.reshape(B, 4, C4).sum(axis=2)               # (B, 4)
    n = H * W * C4
    mean_c = comp_sum / n                                     # per (sample, component)
    quat_var = jnp.sum(comp_sq - n * mean_c * mean_c) / (B * n)   # single global scalar
    inv_den = lax.rsqrt(quat_var + EPS)
    gamma_full = jnp.tile(gamma.reshape(C4), 4)               # (C,) same gamma per component
    scale_c = gamma_full * inv_den                            # (C,)
    mean_full = jnp.repeat(mean_c, C4, axis=1)                # (B, C)
    shift_c = beta.reshape(1, C) - scale_c.reshape(1, C) * mean_full   # (B, C)
    return scale_c, shift_c


# ---------------------------------------------------------------------------
# Module wrapper (NCHW in / NCHW out, matching PyTorch)
# ---------------------------------------------------------------------------
def smooth_dilated_residual_block(x_nchw, params, dilation=2, tile_h=None):
    B, C, H, W = x_nchw.shape
    assert C % 4 == 0
    assert H % 8 == 0 and W % 8 == 0
    assert H % dilation == 0

    vmem_limit, budget = _vmem_budget_bytes()
    if tile_h is None:
        tile_h = _choose_conv_tile_h(H, W, C, dilation, budget)
    assert tile_h % 8 == 0 and H % tile_h == 0 and tile_h % dilation == 0
    fin_tile_h = _choose_fin_tile_h(H, W * C, budget)

    x = jnp.transpose(x_nchw, (0, 2, 3, 1)).astype(jnp.float32)   # NHWC

    # pre_conv1 / pre_conv2 (ShareSepConv with center-delta weight) are identity -> skipped.
    y1, st1 = _conv_stage(x, params["w1_fat"], None, None, dil=dilation,
                          tile_h=tile_h, vmem_limit=vmem_limit, pre_act=False)
    sc1, sh1 = _norm_affine(st1, params["gamma1"], params["beta1"], H, W, C)

    y1 = y1.reshape(B, H, W, C)
    y2, st2 = _conv_stage(y1, params["w2_fat"], sc1, sh1, dil=dilation,
                          tile_h=tile_h, vmem_limit=vmem_limit, pre_act=True)
    sc2, sh2 = _norm_affine(st2, params["gamma2"], params["beta2"], H, W, C)

    out = _finalize(y2, x, sc2, sh2, tile_h=fin_tile_h, vmem_limit=vmem_limit)
    return jnp.transpose(out, (0, 3, 1, 2))                       # back to NCHW


# ---------------------------------------------------------------------------
# Deterministic parameter construction
# ---------------------------------------------------------------------------
def make_quaternion_weight(key, out_ch, in_ch, ksz=3):
    """Standard Hamilton-product quaternion conv weight -> (out_ch, in_ch, k, k)."""
    o4, i4 = out_ch // 4, in_ch // 4
    kr, ki, kj, kk = jax.random.split(key, 4)
    scale = 1.0 / np.sqrt(in_ch * ksz * ksz)
    r = jax.random.normal(kr, (o4, i4, ksz, ksz), jnp.float32) * scale
    i = jax.random.normal(ki, (o4, i4, ksz, ksz), jnp.float32) * scale
    j = jax.random.normal(kj, (o4, i4, ksz, ksz), jnp.float32) * scale
    q = jax.random.normal(kk, (o4, i4, ksz, ksz), jnp.float32) * scale
    row_r = jnp.concatenate([r, -i, -j, -q], axis=1)
    row_i = jnp.concatenate([i, r, -q, j], axis=1)
    row_j = jnp.concatenate([j, q, r, -i], axis=1)
    row_k = jnp.concatenate([q, -j, i, r], axis=1)
    return jnp.concatenate([row_r, row_i, row_j, row_k], axis=0)


def _fat_weight(w_oihw):
    # (O, I, 3, 3) -> (9*I, O) with row index (kh*3 + kw)*I + cin, matching the im2col order.
    C = w_oihw.shape[0]
    return jnp.transpose(w_oihw, (2, 3, 1, 0)).reshape(9 * C, C)


def make_params(key, channel_num):
    k1, k2 = jax.random.split(key, 2)
    w1 = make_quaternion_weight(k1, channel_num, channel_num)   # (C, C, 3, 3) OIHW
    w2 = make_quaternion_weight(k2, channel_num, channel_num)
    C4 = channel_num // 4
    return {
        "w1_oihw": w1,
        "w2_oihw": w2,
        "w1_fat": _fat_weight(w1),
        "w2_fat": _fat_weight(w2),
        "gamma1": jnp.ones((C4,), jnp.float32),     # gamma_init = 1.0
        "beta1": jnp.zeros((channel_num,), jnp.float32),
        "gamma2": jnp.ones((C4,), jnp.float32),
        "beta2": jnp.zeros((channel_num,), jnp.float32),
    }


# ---------------------------------------------------------------------------
# Pure-JAX reference (correctness check only)
# ---------------------------------------------------------------------------
def _ref_qconv(x, w, dil):
    return lax.conv_general_dilated(
        x, w, window_strides=(1, 1),
        padding=[(dil, dil), (dil, dil)], rhs_dilation=(dil, dil),
        dimension_numbers=("NCHW", "OIHW", "NCHW"))


def _ref_qin(x, gamma, beta):
    C = x.shape[1]
    C4 = C // 4
    comps = [x[:, c * C4:(c + 1) * C4] for c in range(4)]
    deltas = [c - jnp.mean(c, axis=(1, 2, 3), keepdims=True) for c in comps]
    qvar = jnp.mean(deltas[0] ** 2 + deltas[1] ** 2 + deltas[2] ** 2 + deltas[3] ** 2)
    denom = jnp.sqrt(qvar + EPS)
    g = gamma.reshape(1, C4, 1, 1)
    b = beta.reshape(1, C, 1, 1)
    outs = [g * (deltas[c] / denom) + b[:, c * C4:(c + 1) * C4] for c in range(4)]
    return jnp.concatenate(outs, axis=1)


def reference_forward(x, params, dilation=2):
    y = jax.nn.relu(_ref_qin(_ref_qconv(x, params["w1_oihw"], dilation),
                             params["gamma1"], params["beta1"]))
    y = _ref_qin(_ref_qconv(y, params["w2_oihw"], dilation),
                 params["gamma2"], params["beta2"])
    return jax.nn.relu(x + y)


# ---------------------------------------------------------------------------
if __name__ == "__main__":
    B, C, H, W = 2, 8, 16, 16          # channel_num must be divisible by 4
    dilation = 2                        # GCANet uses dilation 2 / 4 for these blocks

    key = jax.random.PRNGKey(0)
    kx, kp = jax.random.split(key)
    x = jax.random.normal(kx, (B, C, H, W), jnp.float32)
    params = make_params(kp, C)

    out = smooth_dilated_residual_block(x, params, dilation=dilation)
    out = jax.block_until_ready(out)

    ref = jax.block_until_ready(reference_forward(x, params, dilation=dilation))
    np.testing.assert_allclose(np.asarray(out), np.asarray(ref), rtol=1e-4, atol=1e-4)

    print("KERNEL_OK")
</pallas_src>

<mosaic_0001>
module attributes {stable_mosaic.version = 11 : i64} {
  func.func @_conv_kernel(%arg0: i32, %arg1: i32, %arg2: memref<1x2x16x8xf32, #tpu.memory_space<vmem>>, %arg3: memref<1x16x16x8xf32, #tpu.memory_space<vmem>>, %arg4: memref<1x2x16x8xf32, #tpu.memory_space<vmem>>, %arg5: memref<72x8xf32, #tpu.memory_space<vmem>>, %arg6: memref<1x1x8xf32, #tpu.memory_space<vmem>>, %arg7: memref<1x1x8xf32, #tpu.memory_space<vmem>>, %arg8: memref<1x256x8xf32, #tpu.memory_space<vmem>>, %arg9: memref<1x1x2x8xf32, #tpu.memory_space<vmem>>, %arg10: memref<20x20x8xf32, #tpu.memory_space<vmem>>) attributes {dimension_semantics = [#tpu.dimension_semantics<parallel>, #tpu.dimension_semantics<parallel>], iteration_bounds = array<i64: 2, 1>, scalar_prefetch = 0 : i64, scratch_operands = 1 : i64, tpu.core_type = #tpu.core_type<tc>, window_params = [{transform_indices = @transform_0, window_bounds = array<i64: 1, 2, 16, 8>}, {transform_indices = @transform_1, window_bounds = array<i64: 1, 16, 16, 8>}, {transform_indices = @transform_2, window_bounds = array<i64: 1, 2, 16, 8>}, {pipeline_mode = #tpu.pipeline_mode<synchronous>, transform_indices = @transform_3, window_bounds = array<i64: 72, 8>}, {pipeline_mode = #tpu.pipeline_mode<synchronous>, transform_indices = @transform_4, window_bounds = array<i64: 1, 1, 8>}, {transform_indices = @transform_5, window_bounds = array<i64: 1, 1, 8>}, {transform_indices = @transform_6, window_bounds = array<i64: 1, 256, 8>}, {transform_indices = @transform_7, window_bounds = array<i64: 1, 1, 2, 8>}]} {
    %cst = arith.constant 0.000000e+00 : f32
    %0 = vector.broadcast %cst : f32 to vector<20x2x8xf32>
    %c0 = arith.constant 0 : index
    %c0_0 = arith.constant 0 : index
    %c0_1 = arith.constant 0 : index
    %1 = vector.load %arg10[%c0, %c0_0, %c0_1] : memref<20x20x8xf32, #tpu.memory_space<vmem>>, vector<20x2x8xf32>
    tpu.vector_store %arg10[%c0, %c0_0, %c0_1], %0 {strides = array<i32>} : memref<20x20x8xf32, #tpu.memory_space<vmem>>, vector<20x2x8xf32>,
    %cst_2 = arith.constant 0.000000e+00 : f32
    %2 = vector.broadcast %cst_2 : f32 to vector<20x2x8xf32>
    %c0_3 = arith.constant 0 : index
    %c18 = arith.constant 18 : index
    %c0_4 = arith.constant 0 : index
    %3 = vector.load %arg10[%c0_3, %c18, %c0_4] : memref<20x20x8xf32, #tpu.memory_space<vmem>>, vector<20x2x8xf32>
    tpu.vector_store %arg10[%c0_3, %c18, %c0_4], %2 {strides = array<i32>} : memref<20x20x8xf32, #tpu.memory_space<vmem>>, vector<20x2x8xf32>,
    %c0_5 = arith.constant 0 : index
    %c0_6 = arith.constant 0 : index
    %c0_7 = arith.constant 0 : index
    %c0_8 = arith.constant 0 : index
    %4 = vector.load %arg2[%c0_5, %c0_6, %c0_7, %c0_8] : memref<1x2x16x8xf32, #tpu.memory_space<vmem>>, vector<1x2x16x8xf32>
    %5 = vector.shape_cast %4 : vector<1x2x16x8xf32> to vector<2x16x8xf32>
    %c0_9 = arith.constant 0 : index
    %c2 = arith.constant 2 : index
    %c0_10 = arith.constant 0 : index
    %6 = vector.load %arg10[%c0_9, %c2, %c0_10] : memref<20x20x8xf32, #tpu.memory_space<vmem>>, vector<2x16x8xf32>
    tpu.vector_store %arg10[%c0_9, %c2, %c0_10], %5 {strides = array<i32>} : memref<20x20x8xf32, #tpu.memory_space<vmem>>, vector<2x16x8xf32>,
    %c0_11 = arith.constant 0 : index
    %c0_12 = arith.constant 0 : index
    %c0_13 = arith.constant 0 : index
    %c0_14 = arith.constant 0 : index
    %7 = vector.load %arg3[%c0_11, %c0_12, %c0_13, %c0_14] : memref<1x16x16x8xf32, #tpu.memory_space<vmem>>, vector<1x16x16x8xf32>
    %8 = vector.shape_cast %7 : vector<1x16x16x8xf32> to vector<16x16x8xf32>
    %c2_15 = arith.constant 2 : index
    %c2_16 = arith.constant 2 : index
    %c0_17 = arith.constant 0 : index
    %9 = vector.load %arg10[%c2_15, %c2_16, %c0_17] : memref<20x20x8xf32, #tpu.memory_space<vmem>>, vector<16x16x8xf32>
    tpu.vector_store %arg10[%c2_15, %c2_16, %c0_17], %8 {strides = array<i32>} : memref<20x20x8xf32, #tpu.memory_space<vmem>>, vector<16x16x8xf32>,
    %c0_18 = arith.constant 0 : index
    %c0_19 = arith.constant 0 : index
    %c0_20 = arith.constant 0 : index
    %c0_21 = arith.constant 0 : index
    %10 = vector.load %arg4[%c0_18, %c0_19, %c0_20, %c0_21] : memref<1x2x16x8xf32, #tpu.memory_space<vmem>>, vector<1x2x16x8xf32>
    %11 = vector.shape_cast %10 : vector<1x2x16x8xf32> to vector<2x16x8xf32>
    %c18_22 = arith.constant 18 : index
    %c2_23 = arith.constant 2 : index
    %c0_24 = arith.constant 0 : index
    %12 = vector.load %arg10[%c18_22, %c2_23, %c0_24] : memref<20x20x8xf32, #tpu.memory_space<vmem>>, vector<2x16x8xf32>
    tpu.vector_store %arg10[%c18_22, %c2_23, %c0_24], %11 {strides = array<i32>} : memref<20x20x8xf32, #tpu.memory_space<vmem>>, vector<2x16x8xf32>,
    %c0_i32 = arith.constant 0 : i32
    %13 = arith.cmpi eq, %arg1, %c0_i32 : i32
    %14 = arith.extui %13 : i1 to i32
    %c0_i32_25 = arith.constant 0 : i32
    %15 = arith.cmpi ne, %14, %c0_i32_25 : i32
    scf.if %15 {
      %cst_66 = arith.constant 0.000000e+00 : f32
      %50 = vector.broadcast %cst_66 : f32 to vector<2x20x8xf32>
      %c0_67 = arith.constant 0 : index
      %c0_68 = arith.constant 0 : index
      %c0_69 = arith.constant 0 : index
      %51 = vector.load %arg10[%c0_67, %c0_68, %c0_69] : memref<20x20x8xf32, #tpu.memory_space<vmem>>, vector<2x20x8xf32>
      tpu.vector_store %arg10[%c0_67, %c0_68, %c0_69], %50 {strides = array<i32>} : memref<20x20x8xf32, #tpu.memory_space<vmem>>, vector<2x20x8xf32>,
    } else {
    }
    %c0_i32_26 = arith.constant 0 : i32
    %16 = arith.cmpi eq, %arg1, %c0_i32_26 : i32
    %17 = arith.extui %16 : i1 to i32
    %c0_i32_27 = arith.constant 0 : i32
    %18 = arith.cmpi ne, %17, %c0_i32_27 : i32
    scf.if %18 {
      %cst_66 = arith.constant 0.000000e+00 : f32
      %50 = vector.broadcast %cst_66 : f32 to vector<2x20x8xf32>
      %c18_67 = arith.constant 18 : index
      %c0_68 = arith.constant 0 : index
      %c0_69 = arith.constant 0 : index
      %51 = vector.load %arg10[%c18_67, %c0_68, %c0_69] : memref<20x20x8xf32, #tpu.memory_space<vmem>>, vector<2x20x8xf32>
      tpu.vector_store %arg10[%c18_67, %c0_68, %c0_69], %50 {strides = array<i32>} : memref<20x20x8xf32, #tpu.memory_space<vmem>>, vector<2x20x8xf32>,
    } else {
    }
    %c0_28 = arith.constant 0 : index
    %c0_29 = arith.constant 0 : index
    %c0_30 = arith.constant 0 : index
    %19 = vector.load %arg10[%c0_28, %c0_29, %c0_30] : memref<20x20x8xf32, #tpu.memory_space<vmem>>, vector<16x16x8xf32>
    %20 = vector.shape_cast %19 : vector<16x16x8xf32> to vector<256x8xf32>
    %c0_31 = arith.constant 0 : index
    %c2_32 = arith.constant 2 : index
    %c0_33 = arith.constant 0 : index
    %21 = vector.load %arg10[%c0_31, %c2_32, %c0_33] : memref<20x20x8xf32, #tpu.memory_space<vmem>>, vector<16x16x8xf32>
    %22 = vector.shape_cast %21 : vector<16x16x8xf32> to vector<256x8xf32>
    %c0_34 = arith.constant 0 : index
    %c4 = arith.constant 4 : index
    %c0_35 = arith.constant 0 : index
    %23 = vector.load %arg10[%c0_34, %c4, %c0_35] : memref<20x20x8xf32, #tpu.memory_space<vmem>>, vector<16x16x8xf32>
    %24 = vector.shape_cast %23 : vector<16x16x8xf32> to vector<256x8xf32>
    %c2_36 = arith.constant 2 : index
    %c0_37 = arith.constant 0 : index
    %c0_38 = arith.constant 0 : index
    %25 = vector.load %arg10[%c2_36, %c0_37, %c0_38] : memref<20x20x8xf32, #tpu.memory_space<vmem>>, vector<16x16x8xf32>
    %26 = vector.shape_cast %25 : vector<16x16x8xf32> to vector<256x8xf32>
    %c2_39 = arith.constant 2 : index
    %c2_40 = arith.constant 2 : index
    %c0_41 = arith.constant 0 : index
    %27 = vector.load %arg10[%c2_39, %c2_40, %c0_41] : memref<20x20x8xf32, #tpu.memory_space<vmem>>, vector<16x16x8xf32>
    %28 = vector.shape_cast %27 : vector<16x16x8xf32> to vector<256x8xf32>
    %c2_42 = arith.constant 2 : index
    %c4_43 = arith.constant 4 : index
    %c0_44 = arith.constant 0 : index
    %29 = vector.load %arg10[%c2_42, %c4_43, %c0_44] : memref<20x20x8xf32, #tpu.memory_space<vmem>>, vector<16x16x8xf32>
    %30 = vector.shape_cast %29 : vector<16x16x8xf32> to vector<256x8xf32>
    %c4_45 = arith.constant 4 : index
    %c0_46 = arith.constant 0 : index
    %c0_47 = arith.constant 0 : index
    %31 = vector.load %arg10[%c4_45, %c0_46, %c0_47] : memref<20x20x8xf32, #tpu.memory_space<vmem>>, vector<16x16x8xf32>
    %32 = vector.shape_cast %31 : vector<16x16x8xf32> to vector<256x8xf32>
    %c4_48 = arith.constant 4 : index
    %c2_49 = arith.constant 2 : index
    %c0_50 = arith.constant 0 : index
    %33 = vector.load %arg10[%c4_48, %c2_49, %c0_50] : memref<20x20x8xf32, #tpu.memory_space<vmem>>, vector<16x16x8xf32>
    %34 = vector.shape_cast %33 : vector<16x16x8xf32> to vector<256x8xf32>
    %c4_51 = arith.constant 4 : index
    %c4_52 = arith.constant 4 : index
    %c0_53 = arith.constant 0 : index
    %35 = vector.load %arg10[%c4_51, %c4_52, %c0_53] : memref<20x20x8xf32, #tpu.memory_space<vmem>>, vector<16x16x8xf32>
    %36 = vector.shape_cast %35 : vector<16x16x8xf32> to vector<256x8xf32>
    %37 = tpu.concatenate %20, %22, %24, %26, %28, %30, %32, %34, %36 in 1 : vector<256x8xf32>, vector<256x8xf32>, vector<256x8xf32>, vector<256x8xf32>, vector<256x8xf32>, vector<256x8xf32>, vector<256x8xf32>, vector<256x8xf32>, vector<256x8xf32> -> vector<256x72xf32>
    %c0_54 = arith.constant 0 : index
    %c0_55 = arith.constant 0 : index
    %38 = vector.load %arg5[%c0_54, %c0_55] : memref<72x8xf32, #tpu.memory_space<vmem>>, vector<72x8xf32>
    %cst_56 = arith.constant dense<0.000000e+00> : vector<256x8xf32>
    %39 = tpu.matmul %37, %38, %cst_56 {dimension_numbers = #tpu.dot_dimension_numbers<[1], [0], [0], [1], [0, 0, 1, 1], [], []>} : vector<256x72xf32>, vector<72x8xf32>, vector<256x8xf32> -> vector<256x8xf32>
    %40 = vector.shape_cast %39 : vector<256x8xf32> to vector<1x256x8xf32>
    %c0_57 = arith.constant 0 : index
    %c0_58 = arith.constant 0 : index
    %c0_59 = arith.constant 0 : index
    %41 = vector.load %arg8[%c0_57, %c0_58, %c0_59] : memref<1x256x8xf32, #tpu.memory_space<vmem>>, vector<1x256x8xf32>
    tpu.vector_store %arg8[%c0_57, %c0_58, %c0_59], %40 {strides = array<i32>} : memref<1x256x8xf32, #tpu.memory_space<vmem>>, vector<1x256x8xf32>,
    %cst_60 = arith.constant dense<0.000000e+00> : vector<8xf32>
    %42 = vector.multi_reduction <add>, %39, %cst_60 [0] : vector<256x8xf32> to vector<8xf32>
    %43 = vector.shape_cast %42 : vector<8xf32> to vector<1x8xf32>
    %44 = arith.mulf %39, %39 : vector<256x8xf32>
    %cst_61 = arith.constant dense<0.000000e+00> : vector<8xf32>
    %45 = vector.multi_reduction <add>, %44, %cst_61 [0] : vector<256x8xf32> to vector<8xf32>
    %46 = vector.shape_cast %45 : vector<8xf32> to vector<1x8xf32>
    %47 = tpu.concatenate %43, %46 in 0 : vector<1x8xf32>, vector<1x8xf32> -> vector<2x8xf32>
    %48 = vector.shape_cast %47 : vector<2x8xf32> to vector<1x1x2x8xf32>
    %c0_62 = arith.constant 0 : index
    %c0_63 = arith.constant 0 : index
    %c0_64 = arith.constant 0 : index
    %c0_65 = arith.constant 0 : index
    %49 = vector.load %arg9[%c0_62, %c0_63, %c0_64, %c0_65] : memref<1x1x2x8xf32, #tpu.memory_space<vmem>>, vector<1x1x2x8xf32>
    tpu.vector_store %arg9[%c0_62, %c0_63, %c0_64, %c0_65], %48 {strides = array<i32>} : memref<1x1x2x8xf32, #tpu.memory_space<vmem>>, vector<1x1x2x8xf32>,
    return
  }
  func.func @transform_0(%arg0: i32, %arg1: i32) -> (i32, i32, i32, i32) {
    %c8_i32 = arith.constant 8 : i32
    %0 = arith.muli %arg1, %c8_i32 : i32
    %c1_i32 = arith.constant 1 : i32
    %1 = arith.subi %0, %c1_i32 : i32
    %c0_i32 = arith.constant 0 : i32
    %2 = arith.maxsi %1, %c0_i32 : i32
    %c0_i32_0 = arith.constant 0 : i32
    %c0_i32_1 = arith.constant 0 : i32
    %c0_i32_2 = arith.constant 0 : i32
    return %arg0, %2, %c0_i32_0, %c0_i32_1 : i32, i32, i32, i32
  }
  func.func @transform_1(%arg0: i32, %arg1: i32) -> (i32, i32, i32, i32) {
    %c0_i32 = arith.constant 0 : i32
    %c0_i32_0 = arith.constant 0 : i32
    %c0_i32_1 = arith.constant 0 : i32
    return %arg0, %arg1, %c0_i32, %c0_i32_0 : i32, i32, i32, i32
  }
  func.func @transform_2(%arg0: i32, %arg1: i32) -> (i32, i32, i32, i32) {
    %c1_i32 = arith.constant 1 : i32
    %0 = arith.addi %arg1, %c1_i32 : i32
    %c8_i32 = arith.constant 8 : i32
    %1 = arith.muli %0, %c8_i32 : i32
    %c7_i32 = arith.constant 7 : i32
    %2 = arith.minsi %1, %c7_i32 : i32
    %c0_i32 = arith.constant 0 : i32
    %c0_i32_0 = arith.constant 0 : i32
    %c0_i32_1 = arith.constant 0 : i32
    return %arg0, %2, %c0_i32, %c0_i32_0 : i32, i32, i32, i32
  }
  func.func @transform_3(%arg0: i32, %arg1: i32) -> (i32, i32) {
    %c0_i32 = arith.constant 0 : i32
    %c0_i32_0 = arith.constant 0 : i32
    %c0_i32_1 = arith.constant 0 : i32
    return %c0_i32, %c0_i32_0 : i32, i32
  }
  func.func @transform_4(%arg0: i32, %arg1: i32) -> (i32, i32, i32) {
    %c0_i32 = arith.constant 0 : i32
    %c0_i32_0 = arith.constant 0 : i32
    %c0_i32_1 = arith.constant 0 : i32
    %c0_i32_2 = arith.constant 0 : i32
    return %c0_i32, %c0_i32_0, %c0_i32_1 : i32, i32, i32
  }
  func.func @transform_5(%arg0: i32, %arg1: i32) -> (i32, i32, i32) {
    %c0_i32 = arith.constant 0 : i32
    %c0_i32_0 = arith.constant 0 : i32
    %c0_i32_1 = arith.constant 0 : i32
    return %arg0, %c0_i32, %c0_i32_0 : i32, i32, i32
  }
  func.func @transform_6(%arg0: i32, %arg1: i32) -> (i32, i32, i32) {
    %c0_i32 = arith.constant 0 : i32
    %c0_i32_0 = arith.constant 0 : i32
    return %arg0, %arg1, %c0_i32 : i32, i32, i32
  }
  func.func @transform_7(%arg0: i32, %arg1: i32) -> (i32, i32, i32, i32) {
    %c0_i32 = arith.constant 0 : i32
    %c0_i32_0 = arith.constant 0 : i32
    %c0_i32_1 = arith.constant 0 : i32
    return %arg0, %arg1, %c0_i32, %c0_i32_0 : i32, i32, i32, i32
  }
}

</mosaic_0001>

<llo_original>
// kernel: tpu_custom_call.1
$region0: #{tpu_custom_call.1}
  #allocation0 [shape = 'u32[]', space=smem, size = 0x4, offset = 0x4, fixed_abs, tag = 'smem constant byte address 0x4 - core index']
  #allocation1 [shape = 'u32[144,128]{1,0:T(1,128)}', space=vmem, size = 0x12000, scoped, tag = 'internal scratch']
  #allocation2 [shape = 'f32[20,20,8]{2,1,0:T(8,128)}', space=vmem, size = 0x3c000, scoped, tag = 'scratch operand']
  %s0 = inlined_call_operand.vmem [shape: f32[2,16,16,8], index: 0, kind: input, shape index: {}]
  %s1 = inlined_call_operand.vmem [shape: f32[2,16,16,8], index: 1, kind: input, shape index: {}]
  %s2 = inlined_call_operand.vmem [shape: f32[2,16,16,8], index: 2, kind: input, shape index: {}]
  %s3 = inlined_call_operand.vmem [shape: f32[72,8], index: 3, kind: input, shape index: {}]
  %s4 = inlined_call_operand.vmem [shape: f32[1,1,8], index: 4, kind: input, shape index: {}]
  %s5 = inlined_call_operand.vmem [shape: f32[2,1,8], index: 5, kind: input, shape index: {}]
  %s6 = inlined_call_operand.vmem [shape: f32[2,256,8], index: 6, kind: output, shape index: {0}]
  %s7 = inlined_call_operand.hbm [shape: f32[2,1,2,8], index: 7, kind: output, shape index: {1}]
  %8 = xla_tuple %s6, %s7
  %s9 = sld [smem:[#allocation0]]
  $region69: #{tpu_custom_call.1} parent=0
    _
  %s11 = ssub.s32 1, %s9
  %s12 = scalar_select 0, %s11, %s9
  $region1: #{tpu_custom_call.1} parent=0
    #allocation3 [shape = 'u8[2048]{0}', space=vmem, size = 0x800, scoped, tag = 'output window, operand 1']
    #allocation4 [shape = 's32[2]{0}', space=sflag, size = 0x8, scoped, tag = 'scoped memory for tpu_custom_call.1']
    %13 = vsyncpa [#allocation4], 0
    %s14 = scalar_lea.sflag [#allocation4], 1
    %15 = vsyncpa %s14, 0
    loop: start=0, step=1, limit=4
    $region2: #{tpu_custom_call.1} parent=1 // loop_pre_header
      _
    $region3: #{tpu_custom_call.1} parent=1 // loop_header
      %s17 = sphi 0, %s21
      %p18 = scmp.ge.s32.totalorder %s17, 4
      %s24 = sphi 0, %s36
      %s25 = sphi 0, %s32
      %s26 = sphi 0, %s24
      %s27 = sphi 0, %s25
      %s28 = sphi 0, %s26
      %s29 = sphi 0, %s27
      %s49 = sphi 0, %s51
      %s52 = sphi 0, %s49
      %s53 = sphi 0, %s52
      %s69 = sphi 0, %s53
      %s77 = sphi 0, %s79
      %s80 = sphi 0, %s77
      %s81 = sphi 0, %s80
      %s97 = sphi 0, %s81
      %s113 = sphi 0, %s115
      %s116 = sphi 0, %s113
      %s117 = sphi 0, %s116
      %s133 = sphi 0, %s117
      %s137 = sphi 0, %s137
      %s139 = sphi 0, %s137
      %s140 = sphi 0, %s139
      %s154 = sphi 0, %s140
      %s158 = sphi 0, %s158
      %s160 = sphi 0, %s158
      %s161 = sphi 0, %s160
      %s175 = sphi 0, %s161
      %s181 = sphi 0, %s183
      %s184 = sphi 0, %s181
      %s185 = sphi 0, %s184
      %s201 = sphi 0, %s185
      %s209 = sphi 0, %s211
      %s212 = sphi 0, %s209
      %s213 = sphi 0, %s212
      %s229 = sphi 0, %s213
      %s237 = sphi 0, %s239
      %s240 = sphi 0, %s237
      %s241 = sphi 0, %s240
      %s257 = sphi 0, %s241
    $region4: #{tpu_custom_call.1} parent=1 // loop_header_branch
      %20 = sbr.rel (%p18) target = $region8
    $region5: #{tpu_custom_call.1} parent=1 // loop_body
      %s22 = ssub.s32 %s17, 1
      %s23 = ssub.s32 %s17, 2
      %s30 = sadd.s32 1, %s25
      %p31 = scmp.ge.s32.totalorder %s30, 1
      %s32 = scalar_select %p31, 0, %s30
      %s33 = sadd.s32 1, %s24
      %s34 = scalar_select %p31, %s33, %s24
      %p35 = scmp.ge.s32.totalorder %s34, 2
      %s36 = scalar_select %p35, 0, %s34
      %s37 = smul.u32 %s25, 8
      %s38 = ssub.s32 %s37, 1
      %p39 = scmp.gt.s32.totalorder %s38, 0
      %s40 = scalar_select %p39, %s38, 0
      %s41 = smul.u32 %s32, 8
      %s42 = ssub.s32 %s41, 1
      %p43 = scmp.gt.s32.totalorder %s42, 0
      %s44 = scalar_select %p43, %s42, 0
      %s45 = ssub.s32 %s24, %s36
      %s46 = ssub.s32 %s40, %s44
      %s47 = sor.u32 %s45, %s46
      %p48 = scmp.eq.s32.totalorder %s47, 0
      %s50 = sadd.s32 %s49, 1
      %s51 = scalar_select %p48, %s49, %s50
      %p54 = pneg %p48
      %p55 = scmp.eq.s32.totalorder %s17, 1
      %p56 = por %p54, %p55
      %p57 = scmp.ne.s32.totalorder %s49, %s52
      %p58 = scmp.eq.s32.totalorder %s17, 0
      %p59 = por %p57, %p58
      %p60 = scmp.ne.s32.totalorder %s49, %s52
      %p61 = scmp.eq.s32.totalorder %s22, 1
      %p62 = por %p60, %p61
      %p63 = scmp.ne.s32.totalorder %s52, %s53
      %p64 = scmp.eq.s32.totalorder %s22, 0
      %p65 = por %p63, %p64
      %p66 = scmp.ne.s32.totalorder %s52, %s53
      %p67 = scmp.eq.s32.totalorder %s23, 1
      %p68 = por %p66, %p67
      %p70 = scmp.ne.s32.totalorder %s53, %s69
      %p71 = scmp.eq.s32.totalorder %s23, 0
      %p72 = por %p70, %p71
      %s73 = ssub.s32 %s24, %s36
      %s74 = ssub.s32 %s25, %s32
      %s75 = sor.u32 %s73, %s74
      %p76 = scmp.eq.s32.totalorder %s75, 0
      %s78 = sadd.s32 %s77, 1
      %s79 = scalar_select %p76, %s77, %s78
      %p82 = pneg %p76
      %p83 = scmp.eq.s32.totalorder %s17, 1
      %p84 = por %p82, %p83
      %p85 = scmp.ne.s32.totalorder %s77, %s80
      %p86 = scmp.eq.s32.totalorder %s17, 0
      %p87 = por %p85, %p86
      %p88 = scmp.ne.s32.totalorder %s77, %s80
      %p89 = scmp.eq.s32.totalorder %s22, 1
      %p90 = por %p88, %p89
      %p91 = scmp.ne.s32.totalorder %s80, %s81
      %p92 = scmp.eq.s32.totalorder %s22, 0
      %p93 = por %p91, %p92
      %p94 = scmp.ne.s32.totalorder %s80, %s81
      %p95 = scmp.eq.s32.totalorder %s23, 1
      %p96 = por %p94, %p95
      %p98 = scmp.ne.s32.totalorder %s81, %s97
      %p99 = scmp.eq.s32.totalorder %s23, 0
      %p100 = por %p98, %p99
      %s101 = sadd.s32 %s25, 1
      %s102 = smul.u32 %s101, 8
      %p103 = scmp.lt.s32.totalorder %s102, 7
      %s104 = scalar_select %p103, %s102, 7
      %s105 = sadd.s32 %s32, 1
      %s106 = smul.u32 %s105, 8
      %p107 = scmp.lt.s32.totalorder %s106, 7
      %s108 = scalar_select %p107, %s106, 7
      %s109 = ssub.s32 %s24, %s36
      %s110 = ssub.s32 %s104, %s108
      %s111 = sor.u32 %s109, %s110
      %p112 = scmp.eq.s32.totalorder %s111, 0
      %s114 = sadd.s32 %s113, 1
      %s115 = scalar_select %p112, %s113, %s114
      %p118 = pneg %p112
      %p119 = scmp.eq.s32.totalorder %s17, 1
      %p120 = por %p118, %p119
      %p121 = scmp.ne.s32.totalorder %s113, %s116
      %p122 = scmp.eq.s32.totalorder %s17, 0
      %p123 = por %p121, %p122
      %p124 = scmp.ne.s32.totalorder %s113, %s116
      %p125 = scmp.eq.s32.totalorder %s22, 1
      %p126 = por %p124, %p125
      %p127 = scmp.ne.s32.totalorder %s116, %s117
      %p128 = scmp.eq.s32.totalorder %s22, 0
      %p129 = por %p127, %p128
      %p130 = scmp.ne.s32.totalorder %s116, %s117
      %p131 = scmp.eq.s32.totalorder %s23, 1
      %p132 = por %p130, %p131
      %p134 = scmp.ne.s32.totalorder %s117, %s133
      %p135 = scmp.eq.s32.totalorder %s23, 0
      %p136 = por %p134, %p135
      %s138 = sadd.s32 %s137, 1
      %p141 = scmp.eq.s32.totalorder %s17, 1
      %p142 = scmp.ne.s32.totalorder %s137, %s139
      %p143 = scmp.eq.s32.totalorder %s17, 0
      %p144 = por %p142, %p143
      %p145 = scmp.ne.s32.totalorder %s137, %s139
      %p146 = scmp.eq.s32.totalorder %s22, 1
      %p147 = por %p145, %p146
      %p148 = scmp.ne.s32.totalorder %s139, %s140
      %p149 = scmp.eq.s32.totalorder %s22, 0
      %p150 = por %p148, %p149
      %p151 = scmp.ne.s32.totalorder %s139, %s140
      %p152 = scmp.eq.s32.totalorder %s23, 1
      %p153 = por %p151, %p152
      %p155 = scmp.ne.s32.totalorder %s140, %s154
      %p156 = scmp.eq.s32.totalorder %s23, 0
      %p157 = por %p155, %p156
      %s159 = sadd.s32 %s158, 1
      %p162 = scmp.eq.s32.totalorder %s17, 1
      %p163 = scmp.ne.s32.totalorder %s158, %s160
      %p164 = scmp.eq.s32.totalorder %s17, 0
      %p165 = por %p163, %p164
      %p166 = scmp.ne.s32.totalorder %s158, %s160
      %p167 = scmp.eq.s32.totalorder %s22, 1
      %p168 = por %p166, %p167
      %p169 = scmp.ne.s32.totalorder %s160, %s161
      %p170 = scmp.eq.s32.totalorder %s22, 0
      %p171 = por %p169, %p170
      %p172 = scmp.ne.s32.totalorder %s160, %s161
      %p173 = scmp.eq.s32.totalorder %s23, 1
      %p174 = por %p172, %p173
      %p176 = scmp.ne.s32.totalorder %s161, %s175
      %p177 = scmp.eq.s32.totalorder %s23, 0
      %p178 = por %p176, %p177
      %s179 = ssub.s32 %s24, %s36
      %p180 = scmp.eq.s32.totalorder %s179, 0
      %s182 = sadd.s32 %s181, 1
      %s183 = scalar_select %p180, %s181, %s182
      %p186 = pneg %p180
      %p187 = scmp.eq.s32.totalorder %s17, 1
      %p188 = por %p186, %p187
      %p189 = scmp.ne.s32.totalorder %s181, %s184
      %p190 = scmp.eq.s32.totalorder %s17, 0
      %p191 = por %p189, %p190
      %p192 = scmp.ne.s32.totalorder %s181, %s184
      %p193 = scmp.eq.s32.totalorder %s22, 1
      %p194 = por %p192, %p193
      %p195 = scmp.ne.s32.totalorder %s184, %s185
      %p196 = scmp.eq.s32.totalorder %s22, 0
      %p197 = por %p195, %p196
      %p198 = scmp.ne.s32.totalorder %s184, %s185
      %p199 = scmp.eq.s32.totalorder %s23, 1
      %p200 = por %p198, %p199
      %p202 = scmp.ne.s32.totalorder %s185, %s201
      %p203 = scmp.eq.s32.totalorder %s23, 0
      %p204 = por %p202, %p203
      %s205 = ssub.s32 %s24, %s36
      %s206 = ssub.s32 %s25, %s32
      %s207 = sor.u32 %s205, %s206
      %p208 = scmp.eq.s32.totalorder %s207, 0
      %s210 = sadd.s32 %s209, 1
      %s211 = scalar_select %p208, %s209, %s210
      %p214 = pneg %p208
      %p215 = scmp.eq.s32.totalorder %s17, 1
      %p216 = por %p214, %p215
      %p217 = scmp.ne.s32.totalorder %s209, %s212
      %p218 = scmp.eq.s32.totalorder %s17, 0
      %p219 = por %p217, %p218
      %p220 = scmp.ne.s32.totalorder %s209, %s212
      %p221 = scmp.eq.s32.totalorder %s22, 1
      %p222 = por %p220, %p221
      %p223 = scmp.ne.s32.totalorder %s212, %s213
      %p224 = scmp.eq.s32.totalorder %s22, 0
      %p225 = por %p223, %p224
      %p226 = scmp.ne.s32.totalorder %s212, %s213
      %p227 = scmp.eq.s32.totalorder %s23, 1
      %p228 = por %p226, %p227
      %p230 = scmp.ne.s32.totalorder %s213, %s229
      %p231 = scmp.eq.s32.totalorder %s23, 0
      %p232 = por %p230, %p231
      %s233 = ssub.s32 %s24, %s36
      %s234 = ssub.s32 %s25, %s32
      %s235 = sor.u32 %s233, %s234
      %p236 = scmp.eq.s32.totalorder %s235, 0
      %s238 = sadd.s32 %s237, 1
      %s239 = scalar_select %p236, %s237, %s238
      %p242 = pneg %p236
      %p243 = scmp.eq.s32.totalorder %s17, 1
      %p244 = por %p242, %p243
      %p245 = scmp.ne.s32.totalorder %s237, %s240
      %p246 = scmp.eq.s32.totalorder %s17, 0
      %p247 = por %p245, %p246
      %p248 = scmp.ne.s32.totalorder %s237, %s240
      %p249 = scmp.eq.s32.totalorder %s22, 1
      %p250 = por %p248, %p249
      %p251 = scmp.ne.s32.totalorder %s240, %s241
      %p252 = scmp.eq.s32.totalorder %s22, 0
      %p253 = por %p251, %p252
      %p254 = scmp.ne.s32.totalorder %s240, %s241
      %p255 = scmp.eq.s32.totalorder %s23, 1
      %p256 = por %p254, %p255
      %p258 = scmp.ne.s32.totalorder %s241, %s257
      %p259 = scmp.eq.s32.totalorder %s23, 0
      %p260 = por %p258, %p259
      %p261 = scmp.le.s32.totalorder 1, %s17
      %p262 = scmp.lt.s32.totalorder %s17, 3
      %p263 = pnand %p261, %p262
      %p264 = pneg %p263
      // Predicated region
      $region9: #{tpu_custom_call.1} parent=5 // pred_check
        _
      $region10: #{tpu_custom_call.1} parent=5 // pred_check_branch
        %266 = sbr.rel (%p263) target = $region12
      $region11: #{tpu_custom_call.1} parent=5 // pred_region
        %s267 = ssub.s32 %s17, 1
        // Predicated region
        $region13: #{tpu_custom_call.1} parent=11 // pred_check
          %p268 = pneg %p150
        $region14: #{tpu_custom_call.1} parent=11 // pred_check_branch
          %270 = sbr.rel (%p268) target = $region16
        $region15: #{tpu_custom_call.1} parent=11 // pred_region
          _
        $region16: #{tpu_custom_call.1} parent=11 // pred_fallthru
          _
        // Predicated region
        $region17: #{tpu_custom_call.1} parent=11 // pred_check
          %p271 = pneg %p171
        $region18: #{tpu_custom_call.1} parent=11 // pred_check_branch
          %273 = sbr.rel (%p271) target = $region20
        $region19: #{tpu_custom_call.1} parent=11 // pred_region
          _
        $region20: #{tpu_custom_call.1} parent=11 // pred_fallthru
          _
      $region12: #{tpu_custom_call.1} parent=5 // pred_fallthru
        _
      %p274 = scmp.lt.s32.totalorder %s17, 2
      // Predicated region
      $region21: #{tpu_custom_call.1} parent=5 // pred_check
        %p275 = pneg %p274
      $region22: #{tpu_custom_call.1} parent=5 // pred_check_branch
        %277 = sbr.rel (%p275) target = $region24
      $region23: #{tpu_custom_call.1} parent=5 // pred_region
        // Predicated region
        $region25: #{tpu_custom_call.1} parent=23 // pred_check
          %p278 = pneg %p59
        $region26: #{tpu_custom_call.1} parent=23 // pred_check_branch
          %280 = sbr.rel (%p278) target = $region28
        $region27: #{tpu_custom_call.1} parent=23 // pred_region
          %s281 = smul.u32 %s25, 8
          %s282 = ssub.s32 %s281, 1
          %p283 = scmp.gt.s32.totalorder %s282, 0
          %s284 = scalar_select %p283, %s282, 0
          %s285 = smul.u32 2, %s284
          %p286 = scmp.lt.s32.totalorder %s24, 1
          %s287 = scalar_select %p286, %s24, 1
          %p288 = scmp.lt.s32.totalorder %s285, 15
          %s289 = scalar_select %p288, %s285, 15
          %s290 = smul.addr %s289, 2
          %s291 = smul.addr %s287, 32
          %s292 = sadd.s32 %s290, %s291
          %s293 = smul.addr %s292, 8
          %s294 = scalar_lea.vmem %s0, %s293
          %s295 = smul.u32 %s25, 8
          %s296 = ssub.s32 %s295, 1
          %p297 = scmp.gt.s32.totalorder %s296, 0
          %s298 = scalar_select %p297, %s296, 0
          %s299 = smul.u32 2, %s298
        $region28: #{tpu_custom_call.1} parent=23 // pred_fallthru
          _
        // Predicated region
        $region29: #{tpu_custom_call.1} parent=23 // pred_check
          %p300 = pneg %p87
        $region30: #{tpu_custom_call.1} parent=23 // pred_check_branch
          %302 = sbr.rel (%p300) target = $region32
        $region31: #{tpu_custom_call.1} parent=23 // pred_region
          %s303 = smul.u32 16, %s25
          %p304 = scmp.lt.s32.totalorder %s24, 1
          %s305 = scalar_select %p304, %s24, 1
          %p306 = scmp.lt.s32.totalorder %s303, 15
          %s307 = scalar_select %p306, %s303, 15
          %s308 = smul.addr %s307, 2
          %s309 = smul.addr %s305, 32
          %s310 = sadd.s32 %s308, %s309
          %s311 = smul.addr %s310, 8
          %s312 = scalar_lea.vmem %s1, %s311
          %s313 = smul.u32 16, %s25
        $region32: #{tpu_custom_call.1} parent=23 // pred_fallthru
          _
        // Predicated region
        $region33: #{tpu_custom_call.1} parent=23 // pred_check
          %p314 = pneg %p123
        $region34: #{tpu_custom_call.1} parent=23 // pred_check_branch
          %316 = sbr.rel (%p314) target = $region36
        $region35: #{tpu_custom_call.1} parent=23 // pred_region
          %s317 = sadd.s32 %s25, 1
          %s318 = smul.u32 %s317, 8
          %p319 = scmp.lt.s32.totalorder %s318, 7
          %s320 = scalar_select %p319, %s318, 7
          %s321 = smul.u32 2, %s320
          %p322 = scmp.lt.s32.totalorder %s24, 1
          %s323 = scalar_select %p322, %s24, 1
          %p324 = scmp.lt.s32.totalorder %s321, 15
          %s325 = scalar_select %p324, %s321, 15
          %s326 = smul.addr %s325, 2
          %s327 = smul.addr %s323, 32
          %s328 = sadd.s32 %s326, %s327
          %s329 = smul.addr %s328, 8
          %s330 = scalar_lea.vmem %s2, %s329
          %s331 = sadd.s32 %s25, 1
          %s332 = smul.u32 %s331, 8
          %p333 = scmp.lt.s32.totalorder %s332, 7
          %s334 = scalar_select %p333, %s332, 7
          %s335 = smul.u32 2, %s334
        $region36: #{tpu_custom_call.1} parent=23 // pred_fallthru
          _
        // Predicated region
        $region37: #{tpu_custom_call.1} parent=23 // pred_check
          %p336 = pneg %p191
        $region38: #{tpu_custom_call.1} parent=23 // pred_check_branch
          %338 = sbr.rel (%p336) target = $region40
        $region39: #{tpu_custom_call.1} parent=23 // pred_region
          %p339 = scmp.lt.s32.totalorder %s24, 1
          %s340 = scalar_select %p339, %s24, 1
          %s341 = scalar_lea.vmem %s5, %s340
        $region40: #{tpu_custom_call.1} parent=23 // pred_fallthru
          _
      $region24: #{tpu_custom_call.1} parent=5 // pred_fallthru
        _
      %p342 = scmp.le.s32.totalorder 1, %s17
      %p343 = scmp.lt.s32.totalorder %s17, 3
      %p344 = pnand %p342, %p343
      %p345 = pneg %p344
      // Predicated region
      $region41: #{tpu_custom_call.1} parent=5 // pred_check
        _
      $region42: #{tpu_custom_call.1} parent=5 // pred_check_branch
        %347 = sbr.rel (%p344) target = $region44
      $region43: #{tpu_custom_call.1} parent=5 // pred_region
        %s348 = ssub.s32 %s17, 1
        %s349 = smul.u32 %s27, 8
        %s350 = ssub.s32 %s349, 1
        %p351 = scmp.gt.s32.totalorder %s350, 0
        %s352 = scalar_select %p351, %s350, 0
        %s353 = smul.u32 2, %s352
        %p354 = scmp.lt.s32.totalorder %s26, 1
        %s355 = scalar_select %p354, %s26, 1
        %p356 = scmp.lt.s32.totalorder %s353, 15
        %s357 = scalar_select %p356, %s353, 15
        %s358 = smul.addr %s357, 2
        %s359 = smul.addr %s355, 32
        %s360 = sadd.s32 %s358, %s359
        %s361 = smul.addr %s360, 8
        %s362 = scalar_lea.vmem %s0, %s361
        %p363 = pneg %p65
        %p364 = pneg %p62
        %s365 = smul.u32 16, %s27
        %p366 = scmp.lt.s32.totalorder %s26, 1
        %s367 = scalar_select %p366, %s26, 1
        %p368 = scmp.lt.s32.totalorder %s365, 15
        %s369 = scalar_select %p368, %s365, 15
        %s370 = smul.addr %s369, 2
        %s371 = smul.addr %s367, 32
        %s372 = sadd.s32 %s370, %s371
        %s373 = smul.addr %s372, 8
        %s374 = scalar_lea.vmem %s1, %s373
        %p375 = pneg %p93
        %p376 = pneg %p90
        %s377 = sadd.s32 %s27, 1
        %s378 = smul.u32 %s377, 8
        %p379 = scmp.lt.s32.totalorder %s378, 7
        %s380 = scalar_select %p379, %s378, 7
        %s381 = smul.u32 2, %s380
        %p382 = scmp.lt.s32.totalorder %s26, 1
        %s383 = scalar_select %p382, %s26, 1
        %p384 = scmp.lt.s32.totalorder %s381, 15
        %s385 = scalar_select %p384, %s381, 15
        %s386 = smul.addr %s385, 2
        %s387 = smul.addr %s383, 32
        %s388 = sadd.s32 %s386, %s387
        %s389 = smul.addr %s388, 8
        %s390 = scalar_lea.vmem %s2, %s389
        %p391 = pneg %p129
        %p392 = pneg %p126
        %p393 = pneg %p150
        %p394 = pneg %p147
        %p395 = pneg %p171
        %p396 = pneg %p168
        %p397 = scmp.lt.s32.totalorder %s26, 1
        %s398 = scalar_select %p397, %s26, 1
        %s399 = scalar_lea.vmem %s5, %s398
        %p400 = pneg %p197
        %p401 = pneg %p194
        %p402 = pneg %p225
        %p403 = pneg %p222
        %s404 = smul.u32 32, %s27
        %p405 = scmp.lt.s32.totalorder %s26, 1
        %s406 = scalar_select %p405, %s26, 1
        %p407 = scmp.lt.s32.totalorder %s404, 31
        %s408 = scalar_select %p407, %s404, 31
        %s409 = smul.addr %s406, 32
        %s410 = sadd.s32 %s408, %s409
        %s411 = smul.addr %s410, 8
        %s412 = scalar_lea.vmem %s6, %s411
        %p413 = pneg %p253
        %p414 = pneg %p250
        %s415 = sand.u32 %s240, 1
        %s416 = scalar_lea.sflag [#allocation4], %s415
        %s417 = sand.u32 %s240, 1
        %s418 = smul.addr %s417, 2
        %s419 = scalar_lea.vmem [#allocation3], %s418
        %s420 = smul.u32 %s27, 8
        %s421 = ssub.s32 %s420, 1
        %p422 = scmp.gt.s32.totalorder %s421, 0
        %s423 = scalar_select %p422, %s421, 0
        %s424 = smul.u32 2, %s423
        %p425 = scmp.lt.s32.totalorder %s26, 1
        %s426 = scalar_select %p425, %s26, 1
        %p427 = scmp.lt.s32.totalorder %s424, 15
        %s428 = scalar_select %p427, %s424, 15
        %s429 = smul.addr %s428, 2
        %s430 = smul.addr %s426, 32
        %s431 = sadd.s32 %s429, %s430
        %s432 = smul.addr %s431, 8
        %s433 = scalar_lea.vmem %s0, %s432
        %s434 = smul.u32 %s27, 8
        %s435 = ssub.s32 %s434, 1
        %p436 = scmp.gt.s32.totalorder %s435, 0
        %s437 = scalar_select %p436, %s435, 0
        %s438 = smul.u32 2, %s437
        %s439 = smul.u32 16, %s27
        %p440 = scmp.lt.s32.totalorder %s26, 1
        %s441 = scalar_select %p440, %s26, 1
        %p442 = scmp.lt.s32.totalorder %s439, 15
        %s443 = scalar_select %p442, %s439, 15
        %s444 = smul.addr %s443, 2
        %s445 = smul.addr %s441, 32
        %s446 = sadd.s32 %s444, %s445
        %s447 = smul.addr %s446, 8
        %s448 = scalar_lea.vmem %s1, %s447
        %s449 = smul.u32 16, %s27
        %s450 = sadd.s32 %s27, 1
        %s451 = smul.u32 %s450, 8
        %p452 = scmp.lt.s32.totalorder %s451, 7
        %s453 = scalar_select %p452, %s451, 7
        %s454 = smul.u32 2, %s453
        %p455 = scmp.lt.s32.totalorder %s26, 1
        %s456 = scalar_select %p455, %s26, 1
        %p457 = scmp.lt.s32.totalorder %s454, 15
        %s458 = scalar_select %p457, %s454, 15
        %s459 = smul.addr %s458, 2
        %s460 = smul.addr %s456, 32
        %s461 = sadd.s32 %s459, %s460
        %s462 = smul.addr %s461, 8
        %s463 = scalar_lea.vmem %s2, %s462
        %s464 = sadd.s32 %s27, 1
        %s465 = smul.u32 %s464, 8
        %p466 = scmp.lt.s32.totalorder %s465, 7
        %s467 = scalar_select %p466, %s465, 7
        %s468 = smul.u32 2, %s467
        %p469 = scmp.lt.s32.totalorder %s26, 1
        %s470 = scalar_select %p469, %s26, 1
        %s471 = scalar_lea.vmem %s5, %s470
        %s472 = smul.u32 32, %s27
        %p473 = scmp.lt.s32.totalorder %s26, 1
        %s474 = scalar_select %p473, %s26, 1
        %p475 = scmp.lt.s32.totalorder %s472, 31
        %s476 = scalar_select %p475, %s472, 31
        %s477 = smul.addr %s474, 32
        %s478 = sadd.s32 %s476, %s477
        %s479 = smul.addr %s478, 8
        %s480 = scalar_lea.vmem %s6, %s479
        %s481 = smul.u32 32, %s27
        %vm482 = vcmask 58368
        %483 = vst.msk [vmem:[#allocation2] sm:$0x3] %vm482, 0.0
        %484 = vst.msk [vmem:[#allocation2 + $0x18] sm:$0x3] %vm482, 0.0
        %485 = vst.msk [vmem:[#allocation2 + $0x30] sm:$0x3] %vm482, 0.0
        %486 = vst.msk [vmem:[#allocation2 + $0x48] sm:$0x3] %vm482, 0.0
        %487 = vst.msk [vmem:[#allocation2 + $0x60] sm:$0x3] %vm482, 0.0
        %488 = vst.msk [vmem:[#allocation2 + $0x78] sm:$0x3] %vm482, 0.0
        %489 = vst.msk [vmem:[#allocation2 + $0x90] sm:$0x3] %vm482, 0.0
        %490 = vst.msk [vmem:[#allocation2 + $0xa8] sm:$0x3] %vm482, 0.0
        %491 = vst.msk [vmem:[#allocation2 + $0xc0] sm:$0x3] %vm482, 0.0
        %492 = vst.msk [vmem:[#allocation2 + $0xd8] sm:$0x3] %vm482, 0.0
        %493 = vst.msk [vmem:[#allocation2 + $0xf0] sm:$0x3] %vm482, 0.0
        %494 = vst.msk [vmem:[#allocation2 + $0x108] sm:$0x3] %vm482, 0.0
        %495 = vst.msk [vmem:[#allocation2 + $0x120] sm:$0x3] %vm482, 0.0
        %496 = vst.msk [vmem:[#allocation2 + $0x138] sm:$0x3] %vm482, 0.0
        %497 = vst.msk [vmem:[#allocation2 + $0x150] sm:$0x3] %vm482, 0.0
        %498 = vst.msk [vmem:[#allocation2 + $0x168] sm:$0x3] %vm482, 0.0
        %499 = vst.msk [vmem:[#allocation2 + $0x180] sm:$0x3] %vm482, 0.0
        %500 = vst.msk [vmem:[#allocation2 + $0x198] sm:$0x3] %vm482, 0.0
        %501 = vst.msk [vmem:[#allocation2 + $0x1b0] sm:$0x3] %vm482, 0.0
        %502 = vst.msk [vmem:[#allocation2 + $0x1c8] sm:$0x3] %vm482, 0.0
        %503 = vst.msk [vmem:[#allocation2 + $0x12] sm:$0x3] %vm482, 0.0
        %504 = vst.msk [vmem:[#allocation2 + $0x2a] sm:$0x3] %vm482, 0.0
        %505 = vst.msk [vmem:[#allocation2 + $0x42] sm:$0x3] %vm482, 0.0
        %506 = vst.msk [vmem:[#allocation2 + $0x5a] sm:$0x3] %vm482, 0.0
        %507 = vst.msk [vmem:[#allocation2 + $0x72] sm:$0x3] %vm482, 0.0
        %508 = vst.msk [vmem:[#allocation2 + $0x8a] sm:$0x3] %vm482, 0.0
        %509 = vst.msk [vmem:[#allocation2 + $0xa2] sm:$0x3] %vm482, 0.0
        %510 = vst.msk [vmem:[#allocation2 + $0xba] sm:$0x3] %vm482, 0.0
        %511 = vst.msk [vmem:[#allocation2 + $0xd2] sm:$0x3] %vm482, 0.0
        %512 = vst.msk [vmem:[#allocation2 + $0xea] sm:$0x3] %vm482, 0.0
        %513 = vst.msk [vmem:[#allocation2 + $0x102] sm:$0x3] %vm482, 0.0
        %514 = vst.msk [vmem:[#allocation2 + $0x11a] sm:$0x3] %vm482, 0.0
        %515 = vst.msk [vmem:[#allocation2 + $0x132] sm:$0x3] %vm482, 0.0
        %516 = vst.msk [vmem:[#allocation2 + $0x14a] sm:$0x3] %vm482, 0.0
        %517 = vst.msk [vmem:[#allocation2 + $0x162] sm:$0x3] %vm482, 0.0
        %518 = vst.msk [vmem:[#allocation2 + $0x17a] sm:$0x3] %vm482, 0.0
        %519 = vst.msk [vmem:[#allocation2 + $0x192] sm:$0x3] %vm482, 0.0
        %520 = vst.msk [vmem:[#allocation2 + $0x1aa] sm:$0x3] %vm482, 0.0
        %521 = vst.msk [vmem:[#allocation2 + $0x1c2] sm:$0x3] %vm482, 0.0
        %522 = vst.msk [vmem:[#allocation2 + $0x1da] sm:$0x3] %vm482, 0.0
        %v523 = vld [vmem:[%s433] sm:$0xff]
        %v524 = vld [vmem:[%s433 + $0x8] sm:$0xff]
        %v525 = vld [vmem:[%s433 + $0x10] sm:$0xff]
        %v526 = vld [vmem:[%s433 + $0x18] sm:$0xff]
        %vm527 = vcmask 64512
        %528 = vst.msk [vmem:[#allocation2 + $0x2] sm:$0xff] %vm527, %v523
        %529 = vst.msk [vmem:[#allocation2 + $0xa] sm:$0xff] %vm527, %v524
        %530 = vst.msk [vmem:[#allocation2 + $0x1a] sm:$0xff] %vm527, %v525
        %531 = vst.msk [vmem:[#allocation2 + $0x22] sm:$0xff] %vm527, %v526
        %v532 = vld [vmem:[%s448] sm:$0xff]
        %v533 = vld [vmem:[%s448 + $0x8] sm:$0xff]
        %v534 = vld [vmem:[%s448 + $0x10] sm:$0xff]
        %v535 = vld [vmem:[%s448 + $0x18] sm:$0xff]
        %v536 = vld [vmem:[%s448 + $0x20] sm:$0xff]
        %v537 = vld [vmem:[%s448 + $0x28] sm:$0xff]
        %v538 = vld [vmem:[%s448 + $0x30] sm:$0xff]
        %v539 = vld [vmem:[%s448 + $0x38] sm:$0xff]
        %v540 = vld [vmem:[%s448 + $0x40] sm:$0xff]
        %v541 = vld [vmem:[%s448 + $0x48] sm:$0xff]
        %v542 = vld [vmem:[%s448 + $0x50] sm:$0xff]
        %v543 = vld [vmem:[%s448 + $0x58] sm:$0xff]
        %v544 = vld [vmem:[%s448 + $0x60] sm:$0xff]
        %v545 = vld [vmem:[%s448 + $0x68] sm:$0xff]
        %v546 = vld [vmem:[%s448 + $0x70] sm:$0xff]
        %v547 = vld [vmem:[%s448 + $0x78] sm:$0xff]
        %v548 = vld [vmem:[%s448 + $0x80] sm:$0xff]
        %v549 = vld [vmem:[%s448 + $0x88] sm:$0xff]
        %v550 = vld [vmem:[%s448 + $0x90] sm:$0xff]
        %v551 = vld [vmem:[%s448 + $0x98] sm:$0xff]
        %v552 = vld [vmem:[%s448 + $0xa0] sm:$0xff]
        %v553 = vld [vmem:[%s448 + $0xa8] sm:$0xff]
        %v554 = vld [vmem:[%s448 + $0xb0] sm:$0xff]
        %v555 = vld [vmem:[%s448 + $0xb8] sm:$0xff]
        %v556 = vld [vmem:[%s448 + $0xc0] sm:$0xff]
        %v557 = vld [vmem:[%s448 + $0xc8] sm:$0xff]
        %v558 = vld [vmem:[%s448 + $0xd0] sm:$0xff]
        %v559 = vld [vmem:[%s448 + $0xd8] sm:$0xff]
        %v560 = vld [vmem:[%s448 + $0xe0] sm:$0xff]
        %v561 = vld [vmem:[%s448 + $0xe8] sm:$0xff]
        %v562 = vld [vmem:[%s448 + $0xf0] sm:$0xff]
        %v563 = vld [vmem:[%s448 + $0xf8] sm:$0xff]
        %s564 = scalar_lea.vmem [#allocation2], 48
        %565 = vst.msk [vmem:[%s564 + $0x2] sm:$0xff] %vm527, %v532
        %566 = vst.msk [vmem:[%s564 + $0xa] sm:$0xff] %vm527, %v533
        %567 = vst.msk [vmem:[%s564 + $0x1a] sm:$0xff] %vm527, %v534
        %568 = vst.msk [vmem:[%s564 + $0x22] sm:$0xff] %vm527, %v535
        %569 = vst.msk [vmem:[%s564 + $0x32] sm:$0xff] %vm527, %v536
        %570 = vst.msk [vmem:[%s564 + $0x3a] sm:$0xff] %vm527, %v537
        %571 = vst.msk [vmem:[%s564 + $0x4a] sm:$0xff] %vm527, %v538
        %572 = vst.msk [vmem:[%s564 + $0x52] sm:$0xff] %vm527, %v539
        %573 = vst.msk [vmem:[%s564 + $0x62] sm:$0xff] %vm527, %v540
        %574 = vst.msk [vmem:[%s564 + $0x6a] sm:$0xff] %vm527, %v541
        %575 = vst.msk [vmem:[%s564 + $0x7a] sm:$0xff] %vm527, %v542
        %576 = vst.msk [vmem:[%s564 + $0x82] sm:$0xff] %vm527, %v543
        %577 = vst.msk [vmem:[%s564 + $0x92] sm:$0xff] %vm527, %v544
        %578 = vst.msk [vmem:[%s564 + $0x9a] sm:$0xff] %vm527, %v545
        %579 = vst.msk [vmem:[%s564 + $0xaa] sm:$0xff] %vm527, %v546
        %580 = vst.msk [vmem:[%s564 + $0xb2] sm:$0xff] %vm527, %v547
        %581 = vst.msk [vmem:[%s564 + $0xc2] sm:$0xff] %vm527, %v548
        %582 = vst.msk [vmem:[%s564 + $0xca] sm:$0xff] %vm527, %v549
        %583 = vst.msk [vmem:[%s564 + $0xda] sm:$0xff] %vm527, %v550
        %584 = vst.msk [vmem:[%s564 + $0xe2] sm:$0xff] %vm527, %v551
        %585 = vst.msk [vmem:[%s564 + $0xf2] sm:$0xff] %vm527, %v552
        %586 = vst.msk [vmem:[%s564 + $0xfa] sm:$0xff] %vm527, %v553
        %587 = vst.msk [vmem:[%s564 + $0x10a] sm:$0xff] %vm527, %v554
        %588 = vst.msk [vmem:[%s564 + $0x112] sm:$0xff] %vm527, %v555
        %589 = vst.msk [vmem:[%s564 + $0x122] sm:$0xff] %vm527, %v556
        %590 = vst.msk [vmem:[%s564 + $0x12a] sm:$0xff] %vm527, %v557
        %591 = vst.msk [vmem:[%s564 + $0x13a] sm:$0xff] %vm527, %v558
        %592 = vst.msk [vmem:[%s564 + $0x142] sm:$0xff] %vm527, %v559
        %593 = vst.msk [vmem:[%s564 + $0x152] sm:$0xff] %vm527, %v560
        %594 = vst.msk [vmem:[%s564 + $0x15a] sm:$0xff] %vm527, %v561
        %595 = vst.msk [vmem:[%s564 + $0x16a] sm:$0xff] %vm527, %v562
        %596 = vst.msk [vmem:[%s564 + $0x172] sm:$0xff] %vm527, %v563
        %v597 = vld [vmem:[%s463] sm:$0xff]
        %v598 = vld [vmem:[%s463 + $0x8] sm:$0xff]
        %v599 = vld [vmem:[%s463 + $0x10] sm:$0xff]
        %v600 = vld [vmem:[%s463 + $0x18] sm:$0xff]
        %s601 = scalar_lea.vmem [#allocation2], 432
        %602 = vst.msk [vmem:[%s601 + $0x2] sm:$0xff] %vm527, %v597
        %603 = vst.msk [vmem:[%s601 + $0xa] sm:$0xff] %vm527, %v598
        %604 = vst.msk [vmem:[%s601 + $0x1a] sm:$0xff] %vm527, %v599
        %605 = vst.msk [vmem:[%s601 + $0x22] sm:$0xff] %vm527, %v600
        %p606 = scmp.eq.s32.totalorder %s27, 0
        // Predicated region
        $region45: #{tpu_custom_call.1} parent=43 // pred_check
          %p607 = pneg %p606
        $region46: #{tpu_custom_call.1} parent=43 // pred_check_branch
          %609 = sbr.rel (%p607) target = $region48
        $region47: #{tpu_custom_call.1} parent=43 // pred_region
          %610 = vst.msk [vmem:[#allocation2] sm:$0xff] %vm527, 0.0
          %611 = vst.msk [vmem:[#allocation2 + $0x8] sm:$0xff] %vm527, 0.0
          %vm612 = vcmask 60416
          %613 = vst.msk [vmem:[#allocation2 + $0x10] sm:$0xf] %vm612, 0.0
          %614 = vst.msk [vmem:[#allocation2 + $0x18] sm:$0xff] %vm527, 0.0
          %615 = vst.msk [vmem:[#allocation2 + $0x20] sm:$0xff] %vm527, 0.0
          %616 = vst.msk [vmem:[#allocation2 + $0x28] sm:$0xf] %vm612, 0.0
          %617 = vst.msk [vmem:[%s601] sm:$0xff] %vm527, 0.0
          %618 = vst.msk [vmem:[%s601 + $0x8] sm:$0xff] %vm527, 0.0
          %619 = vst.msk [vmem:[%s601 + $0x10] sm:$0xf] %vm612, 0.0
          %620 = vst.msk [vmem:[%s601 + $0x18] sm:$0xff] %vm527, 0.0
          %621 = vst.msk [vmem:[%s601 + $0x20] sm:$0xff] %vm527, 0.0
          %622 = vst.msk [vmem:[%s601 + $0x28] sm:$0xf] %vm612, 0.0
        $region48: #{tpu_custom_call.1} parent=43 // pred_fallthru
          _
        %v623 = vld [vmem:[#allocation2] sm:$0xff]
        %v624 = vld [vmem:[#allocation2 + $0x8] sm:$0xff]
        %v625 = vld [vmem:[#allocation2 + $0x18] sm:$0xff]
        %v626 = vld [vmem:[#allocation2 + $0x20] sm:$0xff]
        %v627 = vld [vmem:[#allocation2 + $0x30] sm:$0xff]
        %v628 = vld [vmem:[#allocation2 + $0x38] sm:$0xff]
        %v629 = vld [vmem:[#allocation2 + $0x48] sm:$0xff]
        %v630 = vld [vmem:[#allocation2 + $0x50] sm:$0xff]
        %v631 = vld [vmem:[#allocation2 + $0x60] sm:$0xff]
        %v632 = vld [vmem:[#allocation2 + $0x68] sm:$0xff]
        %v633 = vld [vmem:[#allocation2 + $0x78] sm:$0xff]
        %v634 = vld [vmem:[#allocation2 + $0x80] sm:$0xff]
        %v635 = vld [vmem:[#allocation2 + $0x90] sm:$0xff]
        %v636 = vld [vmem:[#allocation2 + $0x98] sm:$0xff]
        %v637 = vld [vmem:[#allocation2 + $0xa8] sm:$0xff]
        %v638 = vld [vmem:[#allocation2 + $0xb0] sm:$0xff]
        %v639 = vld [vmem:[#allocation2 + $0xc0] sm:$0xff]
        %v640 = vld [vmem:[#allocation2 + $0xc8] sm:$0xff]
        %v641 = vld [vmem:[#allocation2 + $0xd8] sm:$0xff]
        %v642 = vld [vmem:[#allocation2 + $0xe0] sm:$0xff]
        %v643 = vld [vmem:[#allocation2 + $0xf0] sm:$0xff]
        %v644 = vld [vmem:[#allocation2 + $0xf8] sm:$0xff]
        %v645 = vld [vmem:[#allocation2 + $0x108] sm:$0xff]
        %v646 = vld [vmem:[#allocation2 + $0x110] sm:$0xff]
        %v647 = vld [vmem:[#allocation2 + $0x120] sm:$0xff]
        %v648 = vld [vmem:[#allocation2 + $0x128] sm:$0xff]
        %v649 = vld [vmem:[#allocation2 + $0x138] sm:$0xff]
        %v650 = vld [vmem:[#allocation2 + $0x140] sm:$0xff]
        %v651 = vld [vmem:[#allocation2 + $0x150] sm:$0xff]
        %v652 = vld [vmem:[#allocation2 + $0x158] sm:$0xff]
        %v653 = vld [vmem:[#allocation2 + $0x168] sm:$0xff]
        %v654 = vld [vmem:[#allocation2 + $0x170] sm:$0xff]
        %v655 = vld [vmem:[#allocation2 + $0x2] sm:$0xff]
        %v656 = vld [vmem:[#allocation2 + $0xa] sm:$0xff]
        %v657 = vld [vmem:[#allocation2 + $0x1a] sm:$0xff]
        %v658 = vld [vmem:[#allocation2 + $0x22] sm:$0xff]
        %v659 = vld [vmem:[#allocation2 + $0x32] sm:$0xff]
        %v660 = vld [vmem:[#allocation2 + $0x3a] sm:$0xff]
        %v661 = vld [vmem:[#allocation2 + $0x4a] sm:$0xff]
        %v662 = vld [vmem:[#allocation2 + $0x52] sm:$0xff]
        %v663 = vld [vmem:[#allocation2 + $0x62] sm:$0xff]
        %v664 = vld [vmem:[#allocation2 + $0x6a] sm:$0xff]
        %v665 = vld [vmem:[#allocation2 + $0x7a] sm:$0xff]
        %v666 = vld [vmem:[#allocation2 + $0x82] sm:$0xff]
        %v667 = vld [vmem:[#allocation2 + $0x92] sm:$0xff]
        %v668 = vld [vmem:[#allocation2 + $0x9a] sm:$0xff]
        %v669 = vld [vmem:[#allocation2 + $0xaa] sm:$0xff]
        %v670 = vld [vmem:[#allocation2 + $0xb2] sm:$0xff]
        %v671 = vld [vmem:[#allocation2 + $0xc2] sm:$0xff]
        %v672 = vld [vmem:[#allocation2 + $0xca] sm:$0xff]
        %v673 = vld [vmem:[#allocation2 + $0xda] sm:$0xff]
        %v674 = vld [vmem:[#allocation2 + $0xe2] sm:$0xff]
        %v675 = vld [vmem:[#allocation2 + $0xf2] sm:$0xff]
        %v676 = vld [vmem:[#allocation2 + $0xfa] sm:$0xff]
        %v677 = vld [vmem:[#allocation2 + $0x10a] sm:$0xff]
        %v678 = vld [vmem:[#allocation2 + $0x112] sm:$0xff]
        %v679 = vld [vmem:[#allocation2 + $0x122] sm:$0xff]
        %v680 = vld [vmem:[#allocation2 + $0x12a] sm:$0xff]
        %v681 = vld [vmem:[#allocation2 + $0x13a] sm:$0xff]
        %v682 = vld [vmem:[#allocation2 + $0x142] sm:$0xff]
        %v683 = vld [vmem:[#allocation2 + $0x152] sm:$0xff]
        %v684 = vld [vmem:[#allocation2 + $0x15a] sm:$0xff]
        %v685 = vld [vmem:[#allocation2 + $0x16a] sm:$0xff]
        %v686 = vld [vmem:[#allocation2 + $0x172] sm:$0xff]
        %v687 = vld [vmem:[#allocation2 + $0x4] sm:$0xff]
        %v688 = vld [vmem:[#allocation2 + $0xc] sm:$0xff]
        %v689 = vld [vmem:[#allocation2 + $0x1c] sm:$0xff]
        %v690 = vld [vmem:[#allocation2 + $0x24] sm:$0xff]
        %v691 = vld [vmem:[#allocation2 + $0x34] sm:$0xff]
        %v692 = vld [vmem:[#allocation2 + $0x3c] sm:$0xff]
        %v693 = vld [vmem:[#allocation2 + $0x4c] sm:$0xff]
        %v694 = vld [vmem:[#allocation2 + $0x54] sm:$0xff]
        %v695 = vld [vmem:[#allocation2 + $0x64] sm:$0xff]
        %v696 = vld [vmem:[#allocation2 + $0x6c] sm:$0xff]
        %v697 = vld [vmem:[#allocation2 + $0x7c] sm:$0xff]
        %v698 = vld [vmem:[#allocation2 + $0x84] sm:$0xff]
        %v699 = vld [vmem:[#allocation2 + $0x94] sm:$0xff]
        %v700 = vld [vmem:[#allocation2 + $0x9c] sm:$0xff]
        %v701 = vld [vmem:[#allocation2 + $0xac] sm:$0xff]
        %v702 = vld [vmem:[#allocation2 + $0xb4] sm:$0xff]
        %v703 = vld [vmem:[#allocation2 + $0xc4] sm:$0xff]
        %v704 = vld [vmem:[#allocation2 + $0xcc] sm:$0xff]
        %v705 = vld [vmem:[#allocation2 + $0xdc] sm:$0xff]
        %v706 = vld [vmem:[#allocation2 + $0xe4] sm:$0xff]
        %v707 = vld [vmem:[#allocation2 + $0xf4] sm:$0xff]
        %v708 = vld [vmem:[#allocation2 + $0xfc] sm:$0xff]
        %v709 = vld [vmem:[#allocation2 + $0x10c] sm:$0xff]
        %v710 = vld [vmem:[#allocation2 + $0x114] sm:$0xff]
        %v711 = vld [vmem:[#allocation2 + $0x124] sm:$0xff]
        %v712 = vld [vmem:[#allocation2 + $0x12c] sm:$0xff]
        %v713 = vld [vmem:[#allocation2 + $0x13c] sm:$0xff]
        %v714 = vld [vmem:[#allocation2 + $0x144] sm:$0xff]
        %v715 = vld [vmem:[#allocation2 + $0x154] sm:$0xff]
        %v716 = vld [vmem:[#allocation2 + $0x15c] sm:$0xff]
        %v717 = vld [vmem:[#allocation2 + $0x16c] sm:$0xff]
        %v718 = vld [vmem:[#allocation2 + $0x174] sm:$0xff]
        %v719 = vld [vmem:[%s564] sm:$0xff]
        %v720 = vld [vmem:[%s564 + $0x8] sm:$0xff]
        %v721 = vld [vmem:[%s564 + $0x18] sm:$0xff]
        %v722 = vld [vmem:[%s564 + $0x20] sm:$0xff]
        %v723 = vld [vmem:[%s564 + $0x30] sm:$0xff]
        %v724 = vld [vmem:[%s564 + $0x38] sm:$0xff]
        %v725 = vld [vmem:[%s564 + $0x48] sm:$0xff]
        %v726 = vld [vmem:[%s564 + $0x50] sm:$0xff]
        %v727 = vld [vmem:[%s564 + $0x60] sm:$0xff]
        %v728 = vld [vmem:[%s564 + $0x68] sm:$0xff]
        %v729 = vld [vmem:[%s564 + $0x78] sm:$0xff]
        %v730 = vld [vmem:[%s564 + $0x80] sm:$0xff]
        %v731 = vld [vmem:[%s564 + $0x90] sm:$0xff]
        %v732 = vld [vmem:[%s564 + $0x98] sm:$0xff]
        %v733 = vld [vmem:[%s564 + $0xa8] sm:$0xff]
        %v734 = vld [vmem:[%s564 + $0xb0] sm:$0xff]
        %v735 = vld [vmem:[%s564 + $0xc0] sm:$0xff]
        %v736 = vld [vmem:[%s564 + $0xc8] sm:$0xff]
        %v737 = vld [vmem:[%s564 + $0xd8] sm:$0xff]
        %v738 = vld [vmem:[%s564 + $0xe0] sm:$0xff]
        %v739 = vld [vmem:[%s564 + $0xf0] sm:$0xff]
        %v740 = vld [vmem:[%s564 + $0xf8] sm:$0xff]
        %v741 = vld [vmem:[%s564 + $0x108] sm:$0xff]
        %v742 = vld [vmem:[%s564 + $0x110] sm:$0xff]
        %v743 = vld [vmem:[%s564 + $0x120] sm:$0xff]
        %v744 = vld [vmem:[%s564 + $0x128] sm:$0xff]
        %v745 = vld [vmem:[%s564 + $0x138] sm:$0xff]
        %v746 = vld [vmem:[%s564 + $0x140] sm:$0xff]
        %v747 = vld [vmem:[%s564 + $0x150] sm:$0xff]
        %v748 = vld [vmem:[%s564 + $0x158] sm:$0xff]
        %v749 = vld [vmem:[%s564 + $0x168] sm:$0xff]
        %v750 = vld [vmem:[%s564 + $0x170] sm:$0xff]
        %v751 = vld [vmem:[%s564 + $0x2] sm:$0xff]
        %v752 = vld [vmem:[%s564 + $0xa] sm:$0xff]
        %v753 = vld [vmem:[%s564 + $0x1a] sm:$0xff]
        %v754 = vld [vmem:[%s564 + $0x22] sm:$0xff]
        %v755 = vld [vmem:[%s564 + $0x32] sm:$0xff]
        %v756 = vld [vmem:[%s564 + $0x3a] sm:$0xff]
        %v757 = vld [vmem:[%s564 + $0x4a] sm:$0xff]
        %v758 = vld [vmem:[%s564 + $0x52] sm:$0xff]
        %v759 = vld [vmem:[%s564 + $0x62] sm:$0xff]
        %v760 = vld [vmem:[%s564 + $0x6a] sm:$0xff]
        %v761 = vld [vmem:[%s564 + $0x7a] sm:$0xff]
        %v762 = vld [vmem:[%s564 + $0x82] sm:$0xff]
        %v763 = vld [vmem:[%s564 + $0x92] sm:$0xff]
        %v764 = vld [vmem:[%s564 + $0x9a] sm:$0xff]
        %v765 = vld [vmem:[%s564 + $0xaa] sm:$0xff]
        %v766 = vld [vmem:[%s564 + $0xb2] sm:$0xff]
        %v767 = vld [vmem:[%s564 + $0xc2] sm:$0xff]
        %v768 = vld [vmem:[%s564 + $0xca] sm:$0xff]
        %v769 = vld [vmem:[%s564 + $0xda] sm:$0xff]
        %v770 = vld [vmem:[%s564 + $0xe2] sm:$0xff]
        %v771 = vld [vmem:[%s564 + $0xf2] sm:$0xff]
        %v772 = vld [vmem:[%s564 + $0xfa] sm:$0xff]
        %v773 = vld [vmem:[%s564 + $0x10a] sm:$0xff]
        %v774 = vld [vmem:[%s564 + $0x112] sm:$0xff]
        %v775 = vld [vmem:[%s564 + $0x122] sm:$0xff]
        %v776 = vld [vmem:[%s564 + $0x12a] sm:$0xff]
        %v777 = vld [vmem:[%s564 + $0x13a] sm:$0xff]
        %v778 = vld [vmem:[%s564 + $0x142] sm:$0xff]
        %v779 = vld [vmem:[%s564 + $0x152] sm:$0xff]
        %v780 = vld [vmem:[%s564 + $0x15a] sm:$0xff]
        %v781 = vld [vmem:[%s564 + $0x16a] sm:$0xff]
        %v782 = vld [vmem:[%s564 + $0x172] sm:$0xff]
        %v783 = vld [vmem:[%s564 + $0x4] sm:$0xff]
        %v784 = vld [vmem:[%s564 + $0xc] sm:$0xff]
        %v785 = vld [vmem:[%s564 + $0x1c] sm:$0xff]
        %v786 = vld [vmem:[%s564 + $0x24] sm:$0xff]
        %v787 = vld [vmem:[%s564 + $0x34] sm:$0xff]
        %v788 = vld [vmem:[%s564 + $0x3c] sm:$0xff]
        %v789 = vld [vmem:[%s564 + $0x4c] sm:$0xff]
        %v790 = vld [vmem:[%s564 + $0x54] sm:$0xff]
        %v791 = vld [vmem:[%s564 + $0x64] sm:$0xff]
        %v792 = vld [vmem:[%s564 + $0x6c] sm:$0xff]
        %v793 = vld [vmem:[%s564 + $0x7c] sm:$0xff]
        %v794 = vld [vmem:[%s564 + $0x84] sm:$0xff]
        %v795 = vld [vmem:[%s564 + $0x94] sm:$0xff]
        %v796 = vld [vmem:[%s564 + $0x9c] sm:$0xff]
        %v797 = vld [vmem:[%s564 + $0xac] sm:$0xff]
        %v798 = vld [vmem:[%s564 + $0xb4] sm:$0xff]
        %v799 = vld [vmem:[%s564 + $0xc4] sm:$0xff]
        %v800 = vld [vmem:[%s564 + $0xcc] sm:$0xff]
        %v801 = vld [vmem:[%s564 + $0xdc] sm:$0xff]
        %v802 = vld [vmem:[%s564 + $0xe4] sm:$0xff]
        %v803 = vld [vmem:[%s564 + $0xf4] sm:$0xff]
        %v804 = vld [vmem:[%s564 + $0xfc] sm:$0xff]
        %v805 = vld [vmem:[%s564 + $0x10c] sm:$0xff]
        %v806 = vld [vmem:[%s564 + $0x114] sm:$0xff]
        %v807 = vld [vmem:[%s564 + $0x124] sm:$0xff]
        %v808 = vld [vmem:[%s564 + $0x12c] sm:$0xff]
        %v809 = vld [vmem:[%s564 + $0x13c] sm:$0xff]
        %v810 = vld [vmem:[%s564 + $0x144] sm:$0xff]
        %v811 = vld [vmem:[%s564 + $0x154] sm:$0xff]
        %v812 = vld [vmem:[%s564 + $0x15c] sm:$0xff]
        %v813 = vld [vmem:[%s564 + $0x16c] sm:$0xff]
        %v814 = vld [vmem:[%s564 + $0x174] sm:$0xff]
        %s815 = scalar_lea.vmem [#allocation2], 96
        %v816 = vld [vmem:[%s815] sm:$0xff]
        %v817 = vld [vmem:[%s815 + $0x8] sm:$0xff]
        %v818 = vld [vmem:[%s815 + $0x18] sm:$0xff]
        %v819 = vld [vmem:[%s815 + $0x20] sm:$0xff]
        %v820 = vld [vmem:[%s815 + $0x30] sm:$0xff]
        %v821 = vld [vmem:[%s815 + $0x38] sm:$0xff]
        %v822 = vld [vmem:[%s815 + $0x48] sm:$0xff]
        %v823 = vld [vmem:[%s815 + $0x50] sm:$0xff]
        %v824 = vld [vmem:[%s815 + $0x60] sm:$0xff]
        %v825 = vld [vmem:[%s815 + $0x68] sm:$0xff]
        %v826 = vld [vmem:[%s815 + $0x78] sm:$0xff]
        %v827 = vld [vmem:[%s815 + $0x80] sm:$0xff]
        %v828 = vld [vmem:[%s815 + $0x90] sm:$0xff]
        %v829 = vld [vmem:[%s815 + $0x98] sm:$0xff]
        %v830 = vld [vmem:[%s815 + $0xa8] sm:$0xff]
        %v831 = vld [vmem:[%s815 + $0xb0] sm:$0xff]
        %v832 = vld [vmem:[%s815 + $0xc0] sm:$0xff]
        %v833 = vld [vmem:[%s815 + $0xc8] sm:$0xff]
        %v834 = vld [vmem:[%s815 + $0xd8] sm:$0xff]
        %v835 = vld [vmem:[%s815 + $0xe0] sm:$0xff]
        %v836 = vld [vmem:[%s815 + $0xf0] sm:$0xff]
        %v837 = vld [vmem:[%s815 + $0xf8] sm:$0xff]
        %v838 = vld [vmem:[%s815 + $0x108] sm:$0xff]
        %v839 = vld [vmem:[%s815 + $0x110] sm:$0xff]
        %v840 = vld [vmem:[%s815 + $0x120] sm:$0xff]
        %v841 = vld [vmem:[%s815 + $0x128] sm:$0xff]
        %v842 = vld [vmem:[%s815 + $0x138] sm:$0xff]
        %v843 = vld [vmem:[%s815 + $0x140] sm:$0xff]
        %v844 = vld [vmem:[%s815 + $0x150] sm:$0xff]
        %v845 = vld [vmem:[%s815 + $0x158] sm:$0xff]
        %v846 = vld [vmem:[%s815 + $0x168] sm:$0xff]
        %v847 = vld [vmem:[%s815 + $0x170] sm:$0xff]
        %v848 = vld [vmem:[%s815 + $0x2] sm:$0xff]
        %v849 = vld [vmem:[%s815 + $0xa] sm:$0xff]
        %v850 = vld [vmem:[%s815 + $0x1a] sm:$0xff]
        %v851 = vld [vmem:[%s815 + $0x22] sm:$0xff]
        %v852 = vld [vmem:[%s815 + $0x32] sm:$0xff]
        %v853 = vld [vmem:[%s815 + $0x3a] sm:$0xff]
        %v854 = vld [vmem:[%s815 + $0x4a] sm:$0xff]
        %v855 = vld [vmem:[%s815 + $0x52] sm:$0xff]
        %v856 = vld [vmem:[%s815 + $0x62] sm:$0xff]
        %v857 = vld [vmem:[%s815 + $0x6a] sm:$0xff]
        %v858 = vld [vmem:[%s815 + $0x7a] sm:$0xff]
        %v859 = vld [vmem:[%s815 + $0x82] sm:$0xff]
        %v860 = vld [vmem:[%s815 + $0x92] sm:$0xff]
        %v861 = vld [vmem:[%s815 + $0x9a] sm:$0xff]
        %v862 = vld [vmem:[%s815 + $0xaa] sm:$0xff]
        %v863 = vld [vmem:[%s815 + $0xb2] sm:$0xff]
        %v864 = vld [vmem:[%s815 + $0xc2] sm:$0xff]
        %v865 = vld [vmem:[%s815 + $0xca] sm:$0xff]
        %v866 = vld [vmem:[%s815 + $0xda] sm:$0xff]
        %v867 = vld [vmem:[%s815 + $0xe2] sm:$0xff]
        %v868 = vld [vmem:[%s815 + $0xf2] sm:$0xff]
        %v869 = vld [vmem:[%s815 + $0xfa] sm:$0xff]
        %v870 = vld [vmem:[%s815 + $0x10a] sm:$0xff]
        %v871 = vld [vmem:[%s815 + $0x112] sm:$0xff]
        %v872 = vld [vmem:[%s815 + $0x122] sm:$0xff]
        %v873 = vld [vmem:[%s815 + $0x12a] sm:$0xff]
        %v874 = vld [vmem:[%s815 + $0x13a] sm:$0xff]
        %v875 = vld [vmem:[%s815 + $0x142] sm:$0xff]
        %v876 = vld [vmem:[%s815 + $0x152] sm:$0xff]
        %v877 = vld [vmem:[%s815 + $0x15a] sm:$0xff]
        %v878 = vld [vmem:[%s815 + $0x16a] sm:$0xff]
        %v879 = vld [vmem:[%s815 + $0x172] sm:$0xff]
        %v880 = vld [vmem:[%s815 + $0x4] sm:$0xff]
        %v881 = vld [vmem:[%s815 + $0xc] sm:$0xff]
        %v882 = vld [vmem:[%s815 + $0x1c] sm:$0xff]
        %v883 = vld [vmem:[%s815 + $0x24] sm:$0xff]
        %v884 = vld [vmem:[%s815 + $0x34] sm:$0xff]
        %v885 = vld [vmem:[%s815 + $0x3c] sm:$0xff]
        %v886 = vld [vmem:[%s815 + $0x4c] sm:$0xff]
        %v887 = vld [vmem:[%s815 + $0x54] sm:$0xff]
        %v888 = vld [vmem:[%s815 + $0x64] sm:$0xff]
        %v889 = vld [vmem:[%s815 + $0x6c] sm:$0xff]
        %v890 = vld [vmem:[%s815 + $0x7c] sm:$0xff]
        %v891 = vld [vmem:[%s815 + $0x84] sm:$0xff]
        %v892 = vld [vmem:[%s815 + $0x94] sm:$0xff]
        %v893 = vld [vmem:[%s815 + $0x9c] sm:$0xff]
        %v894 = vld [vmem:[%s815 + $0xac] sm:$0xff]
        %v895 = vld [vmem:[%s815 + $0xb4] sm:$0xff]
        %v896 = vld [vmem:[%s815 + $0xc4] sm:$0xff]
        %v897 = vld [vmem:[%s815 + $0xcc] sm:$0xff]
        %v898 = vld [vmem:[%s815 + $0xdc] sm:$0xff]
        %v899 = vld [vmem:[%s815 + $0xe4] sm:$0xff]
        %v900 = vld [vmem:[%s815 + $0xf4] sm:$0xff]
        %v901 = vld [vmem:[%s815 + $0xfc] sm:$0xff]
        %v902 = vld [vmem:[%s815 + $0x10c] sm:$0xff]
        %v903 = vld [vmem:[%s815 + $0x114] sm:$0xff]
        %v904 = vld [vmem:[%s815 + $0x124] sm:$0xff]
        %v905 = vld [vmem:[%s815 + $0x12c] sm:$0xff]
        %v906 = vld [vmem:[%s815 + $0x13c] sm:$0xff]
        %v907 = vld [vmem:[%s815 + $0x144] sm:$0xff]
        %v908 = vld [vmem:[%s815 + $0x154] sm:$0xff]
        %v909 = vld [vmem:[%s815 + $0x15c] sm:$0xff]
        %v910 = vld [vmem:[%s815 + $0x16c] sm:$0xff]
        %v911 = vld [vmem:[%s815 + $0x174] sm:$0xff]
        %944 = vrot.lane.b32.xlu0 %v655, 8
        %v945 = vpop.permute.xlu0 %944
        %946 = vrot.lane.b32.xlu0 %v656, 8
        %v947 = vpop.permute.xlu0 %946
        %948 = vrot.lane.b32.xlu0 %v657, 8
        %v949 = vpop.permute.xlu0 %948
        %950 = vrot.lane.b32.xlu0 %v658, 8
        %v951 = vpop.permute.xlu0 %950
        %952 = vrot.lane.b32.xlu0 %v659, 8
        %v953 = vpop.permute.xlu0 %952
        %954 = vrot.lane.b32.xlu0 %v660, 8
        %v955 = vpop.permute.xlu0 %954
        %956 = vrot.lane.b32.xlu0 %v661, 8
        %v957 = vpop.permute.xlu0 %956
        %958 = vrot.lane.b32.xlu0 %v662, 8
        %v959 = vpop.permute.xlu0 %958
        %960 = vrot.lane.b32.xlu0 %v663, 8
        %v961 = vpop.permute.xlu0 %960
        %962 = vrot.lane.b32.xlu0 %v664, 8
        %v963 = vpop.permute.xlu0 %962
        %964 = vrot.lane.b32.xlu0 %v665, 8
        %v965 = vpop.permute.xlu0 %964
        %966 = vrot.lane.b32.xlu0 %v666, 8
        %v967 = vpop.permute.xlu0 %966
        %968 = vrot.lane.b32.xlu0 %v667, 8
        %v969 = vpop.permute.xlu0 %968
        %970 = vrot.lane.b32.xlu0 %v668, 8
        %v971 = vpop.permute.xlu0 %970
        %972 = vrot.lane.b32.xlu0 %v669, 8
        %v973 = vpop.permute.xlu0 %972
        %974 = vrot.lane.b32.xlu0 %v670, 8
        %v975 = vpop.permute.xlu0 %974
        %976 = vrot.lane.b32.xlu0 %v671, 8
        %v977 = vpop.permute.xlu0 %976
        %978 = vrot.lane.b32.xlu0 %v672, 8
        %v979 = vpop.permute.xlu0 %978
        %980 = vrot.lane.b32.xlu0 %v673, 8
        %v981 = vpop.permute.xlu0 %980
        %982 = vrot.lane.b32.xlu0 %v674, 8
        %v983 = vpop.permute.xlu0 %982
        %984 = vrot.lane.b32.xlu0 %v675, 8
        %v985 = vpop.permute.xlu0 %984
        %986 = vrot.lane.b32.xlu0 %v676, 8
        %v987 = vpop.permute.xlu0 %986
        %988 = vrot.lane.b32.xlu0 %v677, 8
        %v989 = vpop.permute.xlu0 %988
        %990 = vrot.lane.b32.xlu0 %v678, 8
        %v991 = vpop.permute.xlu0 %990
        %992 = vrot.lane.b32.xlu0 %v679, 8
        %v993 = vpop.permute.xlu0 %992
        %994 = vrot.lane.b32.xlu0 %v680, 8
        %v995 = vpop.permute.xlu0 %994
        %996 = vrot.lane.b32.xlu0 %v681, 8
        %v997 = vpop.permute.xlu0 %996
        %998 = vrot.lane.b32.xlu0 %v682, 8
        %v999 = vpop.permute.xlu0 %998
        %1000 = vrot.lane.b32.xlu0 %v683, 8
        %v1001 = vpop.permute.xlu0 %1000
        %1002 = vrot.lane.b32.xlu0 %v684, 8
        %v1003 = vpop.permute.xlu0 %1002
        %1004 = vrot.lane.b32.xlu0 %v685, 8
        %v1005 = vpop.permute.xlu0 %1004
        %1006 = vrot.lane.b32.xlu0 %v686, 8
        %v1007 = vpop.permute.xlu0 %1006
        %1072 = vrot.lane.b32.xlu0 %v687, 16
        %v1073 = vpop.permute.xlu0 %1072
        %1074 = vrot.lane.b32.xlu0 %v688, 16
        %v1075 = vpop.permute.xlu0 %1074
        %1076 = vrot.lane.b32.xlu0 %v689, 16
        %v1077 = vpop.permute.xlu0 %1076
        %1078 = vrot.lane.b32.xlu0 %v690, 16
        %v1079 = vpop.permute.xlu0 %1078
        %1080 = vrot.lane.b32.xlu0 %v691, 16
        %v1081 = vpop.permute.xlu0 %1080
        %1082 = vrot.lane.b32.xlu0 %v692, 16
        %v1083 = vpop.permute.xlu0 %1082
        %1084 = vrot.lane.b32.xlu0 %v693, 16
        %v1085 = vpop.permute.xlu0 %1084
        %1086 = vrot.lane.b32.xlu0 %v694, 16
        %v1087 = vpop.permute.xlu0 %1086
        %1088 = vrot.lane.b32.xlu0 %v695, 16
        %v1089 = vpop.permute.xlu0 %1088
        %1090 = vrot.lane.b32.xlu0 %v696, 16
        %v1091 = vpop.permute.xlu0 %1090
        %1092 = vrot.lane.b32.xlu0 %v697, 16
        %v1093 = vpop.permute.xlu0 %1092
        %1094 = vrot.lane.b32.xlu0 %v698, 16
        %v1095 = vpop.permute.xlu0 %1094
        %1096 = vrot.lane.b32.xlu0 %v699, 16
        %v1097 = vpop.permute.xlu0 %1096
        %1098 = vrot.lane.b32.xlu0 %v700, 16
        %v1099 = vpop.permute.xlu0 %1098
        %1100 = vrot.lane.b32.xlu0 %v701, 16
        %v1101 = vpop.permute.xlu0 %1100
        %1102 = vrot.lane.b32.xlu0 %v702, 16
        %v1103 = vpop.permute.xlu0 %1102
        %1104 = vrot.lane.b32.xlu0 %v703, 16
        %v1105 = vpop.permute.xlu0 %1104
        %1106 = vrot.lane.b32.xlu0 %v704, 16
        %v1107 = vpop.permute.xlu0 %1106
        %1108 = vrot.lane.b32.xlu0 %v705, 16
        %v1109 = vpop.permute.xlu0 %1108
        %1110 = vrot.lane.b32.xlu0 %v706, 16
        %v1111 = vpop.permute.xlu0 %1110
        %1112 = vrot.lane.b32.xlu0 %v707, 16
        %v1113 = vpop.permute.xlu0 %1112
        %1114 = vrot.lane.b32.xlu0 %v708, 16
        %v1115 = vpop.permute.xlu0 %1114
        %1116 = vrot.lane.b32.xlu0 %v709, 16
        %v1117 = vpop.permute.xlu0 %1116
        %1118 = vrot.lane.b32.xlu0 %v710, 16
        %v1119 = vpop.permute.xlu0 %1118
        %1120 = vrot.lane.b32.xlu0 %v711, 16
        %v1121 = vpop.permute.xlu0 %1120
        %1122 = vrot.lane.b32.xlu0 %v712, 16
        %v1123 = vpop.permute.xlu0 %1122
        %1124 = vrot.lane.b32.xlu0 %v713, 16
        %v1125 = vpop.permute.xlu0 %1124
        %1126 = vrot.lane.b32.xlu0 %v714, 16
        %v1127 = vpop.permute.xlu0 %1126
        %1128 = vrot.lane.b32.xlu0 %v715, 16
        %v1129 = vpop.permute.xlu0 %1128
        %1130 = vrot.lane.b32.xlu0 %v716, 16
        %v1131 = vpop.permute.xlu0 %1130
        %1132 = vrot.lane.b32.xlu0 %v717, 16
        %v1133 = vpop.permute.xlu0 %1132
        %1134 = vrot.lane.b32.xlu0 %v718, 16
        %v1135 = vpop.permute.xlu0 %1134
        %1200 = vrot.lane.b32.xlu0 %v719, 24
        %v1201 = vpop.permute.xlu0 %1200
        %1202 = vrot.lane.b32.xlu0 %v720, 24
        %v1203 = vpop.permute.xlu0 %1202
        %1204 = vrot.lane.b32.xlu0 %v721, 24
        %v1205 = vpop.permute.xlu0 %1204
        %1206 = vrot.lane.b32.xlu0 %v722, 24
        %v1207 = vpop.permute.xlu0 %1206
        %1208 = vrot.lane.b32.xlu0 %v723, 24
        %v1209 = vpop.permute.xlu0 %1208
        %1210 = vrot.lane.b32.xlu0 %v724, 24
        %v1211 = vpop.permute.xlu0 %1210
        %1212 = vrot.lane.b32.xlu0 %v725, 24
        %v1213 = vpop.permute.xlu0 %1212
        %1214 = vrot.lane.b32.xlu0 %v726, 24
        %v1215 = vpop.permute.xlu0 %1214
        %1216 = vrot.lane.b32.xlu0 %v727, 24
        %v1217 = vpop.permute.xlu0 %1216
        %1218 = vrot.lane.b32.xlu0 %v728, 24
        %v1219 = vpop.permute.xlu0 %1218
        %1220 = vrot.lane.b32.xlu0 %v729, 24
        %v1221 = vpop.permute.xlu0 %1220
        %1222 = vrot.lane.b32.xlu0 %v730, 24
        %v1223 = vpop.permute.xlu0 %1222
        %1224 = vrot.lane.b32.xlu0 %v731, 24
        %v1225 = vpop.permute.xlu0 %1224
        %1226 = vrot.lane.b32.xlu0 %v732, 24
        %v1227 = vpop.permute.xlu0 %1226
        %1228 = vrot.lane.b32.xlu0 %v733, 24
        %v1229 = vpop.permute.xlu0 %1228
        %1230 = vrot.lane.b32.xlu0 %v734, 24
        %v1231 = vpop.permute.xlu0 %1230
        %1232 = vrot.lane.b32.xlu0 %v735, 24
        %v1233 = vpop.permute.xlu0 %1232
        %1234 = vrot.lane.b32.xlu0 %v736, 24
        %v1235 = vpop.permute.xlu0 %1234
        %1236 = vrot.lane.b32.xlu0 %v737, 24
        %v1237 = vpop.permute.xlu0 %1236
        %1238 = vrot.lane.b32.xlu0 %v738, 24
        %v1239 = vpop.permute.xlu0 %1238
        %1240 = vrot.lane.b32.xlu0 %v739, 24
        %v1241 = vpop.permute.xlu0 %1240
        %1242 = vrot.lane.b32.xlu0 %v740, 24
        %v1243 = vpop.permute.xlu0 %1242
        %1244 = vrot.lane.b32.xlu0 %v741, 24
        %v1245 = vpop.permute.xlu0 %1244
        %1246 = vrot.lane.b32.xlu0 %v742, 24
        %v1247 = vpop.permute.xlu0 %1246
        %1248 = vrot.lane.b32.xlu0 %v743, 24
        %v1249 = vpop.permute.xlu0 %1248
        %1250 = vrot.lane.b32.xlu0 %v744, 24
        %v1251 = vpop.permute.xlu0 %1250
        %1252 = vrot.lane.b32.xlu0 %v745, 24
        %v1253 = vpop.permute.xlu0 %1252
        %1254 = vrot.lane.b32.xlu0 %v746, 24
        %v1255 = vpop.permute.xlu0 %1254
        %1256 = vrot.lane.b32.xlu0 %v747, 24
        %v1257 = vpop.permute.xlu0 %1256
        %1258 = vrot.lane.b32.xlu0 %v748, 24
        %v1259 = vpop.permute.xlu0 %1258
        %1260 = vrot.lane.b32.xlu0 %v749, 24
        %v1261 = vpop.permute.xlu0 %1260
        %1262 = vrot.lane.b32.xlu0 %v750, 24
        %v1263 = vpop.permute.xlu0 %1262
        %1328 = vrot.lane.b32.xlu0 %v751, 32
        %v1329 = vpop.permute.xlu0 %1328
        %1330 = vrot.lane.b32.xlu0 %v752, 32
        %v1331 = vpop.permute.xlu0 %1330
        %1332 = vrot.lane.b32.xlu0 %v753, 32
        %v1333 = vpop.permute.xlu0 %1332
        %1334 = vrot.lane.b32.xlu0 %v754, 32
        %v1335 = vpop.permute.xlu0 %1334
        %1336 = vrot.lane.b32.xlu0 %v755, 32
        %v1337 = vpop.permute.xlu0 %1336
        %1338 = vrot.lane.b32.xlu0 %v756, 32
        %v1339 = vpop.permute.xlu0 %1338
        %1340 = vrot.lane.b32.xlu0 %v757, 32
        %v1341 = vpop.permute.xlu0 %1340
        %1342 = vrot.lane.b32.xlu0 %v758, 32
        %v1343 = vpop.permute.xlu0 %1342
        %1344 = vrot.lane.b32.xlu0 %v759, 32
        %v1345 = vpop.permute.xlu0 %1344
        %1346 = vrot.lane.b32.xlu0 %v760, 32
        %v1347 = vpop.permute.xlu0 %1346
        %1348 = vrot.lane.b32.xlu0 %v761, 32
        %v1349 = vpop.permute.xlu0 %1348
        %1350 = vrot.lane.b32.xlu0 %v762, 32
        %v1351 = vpop.permute.xlu0 %1350
        %1352 = vrot.lane.b32.xlu0 %v763, 32
        %v1353 = vpop.permute.xlu0 %1352
        %1354 = vrot.lane.b32.xlu0 %v764, 32
        %v1355 = vpop.permute.xlu0 %1354
        %1356 = vrot.lane.b32.xlu0 %v765, 32
        %v1357 = vpop.permute.xlu0 %1356
        %1358 = vrot.lane.b32.xlu0 %v766, 32
        %v1359 = vpop.permute.xlu0 %1358
        %1360 = vrot.lane.b32.xlu0 %v767, 32
        %v1361 = vpop.permute.xlu0 %1360
        %1362 = vrot.lane.b32.xlu0 %v768, 32
        %v1363 = vpop.permute.xlu0 %1362
        %1364 = vrot.lane.b32.xlu0 %v769, 32
        %v1365 = vpop.permute.xlu0 %1364
        %1366 = vrot.lane.b32.xlu0 %v770, 32
        %v1367 = vpop.permute.xlu0 %1366
        %1368 = vrot.lane.b32.xlu0 %v771, 32
        %v1369 = vpop.permute.xlu0 %1368
        %1370 = vrot.lane.b32.xlu0 %v772, 32
        %v1371 = vpop.permute.xlu0 %1370
        %1372 = vrot.lane.b32.xlu0 %v773, 32
        %v1373 = vpop.permute.xlu0 %1372
        %1374 = vrot.lane.b32.xlu0 %v774, 32
        %v1375 = vpop.permute.xlu0 %1374
        %1376 = vrot.lane.b32.xlu0 %v775, 32
        %v1377 = vpop.permute.xlu0 %1376
        %1378 = vrot.lane.b32.xlu0 %v776, 32
        %v1379 = vpop.permute.xlu0 %1378
        %1380 = vrot.lane.b32.xlu0 %v777, 32
        %v1381 = vpop.permute.xlu0 %1380
        %1382 = vrot.lane.b32.xlu0 %v778, 32
        %v1383 = vpop.permute.xlu0 %1382
        %1384 = vrot.lane.b32.xlu0 %v779, 32
        %v1385 = vpop.permute.xlu0 %1384
        %1386 = vrot.lane.b32.xlu0 %v780, 32
        %v1387 = vpop.permute.xlu0 %1386
        %1388 = vrot.lane.b32.xlu0 %v781, 32
        %v1389 = vpop.permute.xlu0 %1388
        %1390 = vrot.lane.b32.xlu0 %v782, 32
        %v1391 = vpop.permute.xlu0 %1390
        %1456 = vrot.lane.b32.xlu0 %v783, 40
        %v1457 = vpop.permute.xlu0 %1456
        %1458 = vrot.lane.b32.xlu0 %v784, 40
        %v1459 = vpop.permute.xlu0 %1458
        %1460 = vrot.lane.b32.xlu0 %v785, 40
        %v1461 = vpop.permute.xlu0 %1460
        %1462 = vrot.lane.b32.xlu0 %v786, 40
        %v1463 = vpop.permute.xlu0 %1462
        %1464 = vrot.lane.b32.xlu0 %v787, 40
        %v1465 = vpop.permute.xlu0 %1464
        %1466 = vrot.lane.b32.xlu0 %v788, 40
        %v1467 = vpop.permute.xlu0 %1466
        %1468 = vrot.lane.b32.xlu0 %v789, 40
        %v1469 = vpop.permute.xlu0 %1468
        %1470 = vrot.lane.b32.xlu0 %v790, 40
        %v1471 = vpop.permute.xlu0 %1470
        %1472 = vrot.lane.b32.xlu0 %v791, 40
        %v1473 = vpop.permute.xlu0 %1472
        %1474 = vrot.lane.b32.xlu0 %v792, 40
        %v1475 = vpop.permute.xlu0 %1474
        %1476 = vrot.lane.b32.xlu0 %v793, 40
        %v1477 = vpop.permute.xlu0 %1476
        %1478 = vrot.lane.b32.xlu0 %v794, 40
        %v1479 = vpop.permute.xlu0 %1478
        %1480 = vrot.lane.b32.xlu0 %v795, 40
        %v1481 = vpop.permute.xlu0 %1480
        %1482 = vrot.lane.b32.xlu0 %v796, 40
        %v1483 = vpop.permute.xlu0 %1482
        %1484 = vrot.lane.b32.xlu0 %v797, 40
        %v1485 = vpop.permute.xlu0 %1484
        %1486 = vrot.lane.b32.xlu0 %v798, 40
        %v1487 = vpop.permute.xlu0 %1486
        %1488 = vrot.lane.b32.xlu0 %v799, 40
        %v1489 = vpop.permute.xlu0 %1488
        %1490 = vrot.lane.b32.xlu0 %v800, 40
        %v1491 = vpop.permute.xlu0 %1490
        %1492 = vrot.lane.b32.xlu0 %v801, 40
        %v1493 = vpop.permute.xlu0 %1492
        %1494 = vrot.lane.b32.xlu0 %v802, 40
        %v1495 = vpop.permute.xlu0 %1494
        %1496 = vrot.lane.b32.xlu0 %v803, 40
        %v1497 = vpop.permute.xlu0 %1496
        %1498 = vrot.lane.b32.xlu0 %v804, 40
        %v1499 = vpop.permute.xlu0 %1498
        %1500 = vrot.lane.b32.xlu0 %v805, 40
        %v1501 = vpop.permute.xlu0 %1500
        %1502 = vrot.lane.b32.xlu0 %v806, 40
        %v1503 = vpop.permute.xlu0 %1502
        %1504 = vrot.lane.b32.xlu0 %v807, 40
        %v1505 = vpop.permute.xlu0 %1504
        %1506 = vrot.lane.b32.xlu0 %v808, 40
        %v1507 = vpop.permute.xlu0 %1506
        %1508 = vrot.lane.b32.xlu0 %v809, 40
        %v1509 = vpop.permute.xlu0 %1508
        %1510 = vrot.lane.b32.xlu0 %v810, 40
        %v1511 = vpop.permute.xlu0 %1510
        %1512 = vrot.lane.b32.xlu0 %v811, 40
        %v1513 = vpop.permute.xlu0 %1512
        %1514 = vrot.lane.b32.xlu0 %v812, 40
        %v1515 = vpop.permute.xlu0 %1514
        %1516 = vrot.lane.b32.xlu0 %v813, 40
        %v1517 = vpop.permute.xlu0 %1516
        %1518 = vrot.lane.b32.xlu0 %v814, 40
        %v1519 = vpop.permute.xlu0 %1518
        %1584 = vrot.lane.b32.xlu0 %v816, 48
        %v1585 = vpop.permute.xlu0 %1584
        %1586 = vrot.lane.b32.xlu0 %v817, 48
        %v1587 = vpop.permute.xlu0 %1586
        %1588 = vrot.lane.b32.xlu0 %v818, 48
        %v1589 = vpop.permute.xlu0 %1588
        %1590 = vrot.lane.b32.xlu0 %v819, 48
        %v1591 = vpop.permute.xlu0 %1590
        %1592 = vrot.lane.b32.xlu0 %v820, 48
        %v1593 = vpop.permute.xlu0 %1592
        %1594 = vrot.lane.b32.xlu0 %v821, 48
        %v1595 = vpop.permute.xlu0 %1594
        %1596 = vrot.lane.b32.xlu0 %v822, 48
        %v1597 = vpop.permute.xlu0 %1596
        %1598 = vrot.lane.b32.xlu0 %v823, 48
        %v1599 = vpop.permute.xlu0 %1598
        %1600 = vrot.lane.b32.xlu0 %v824, 48
        %v1601 = vpop.permute.xlu0 %1600
        %1602 = vrot.lane.b32.xlu0 %v825, 48
        %v1603 = vpop.permute.xlu0 %1602
        %1604 = vrot.lane.b32.xlu0 %v826, 48
        %v1605 = vpop.permute.xlu0 %1604
        %1606 = vrot.lane.b32.xlu0 %v827, 48
        %v1607 = vpop.permute.xlu0 %1606
        %1608 = vrot.lane.b32.xlu0 %v828, 48
        %v1609 = vpop.permute.xlu0 %1608
        %1610 = vrot.lane.b32.xlu0 %v829, 48
        %v1611 = vpop.permute.xlu0 %1610
        %1612 = vrot.lane.b32.xlu0 %v830, 48
        %v1613 = vpop.permute.xlu0 %1612
        %1614 = vrot.lane.b32.xlu0 %v831, 48
        %v1615 = vpop.permute.xlu0 %1614
        %1616 = vrot.lane.b32.xlu0 %v832, 48
        %v1617 = vpop.permute.xlu0 %1616
        %1618 = vrot.lane.b32.xlu0 %v833, 48
        %v1619 = vpop.permute.xlu0 %1618
        %1620 = vrot.lane.b32.xlu0 %v834, 48
        %v1621 = vpop.permute.xlu0 %1620
        %1622 = vrot.lane.b32.xlu0 %v835, 48
        %v1623 = vpop.permute.xlu0 %1622
        %1624 = vrot.lane.b32.xlu0 %v836, 48
        %v1625 = vpop.permute.xlu0 %1624
        %1626 = vrot.lane.b32.xlu0 %v837, 48
        %v1627 = vpop.permute.xlu0 %1626
        %1628 = vrot.lane.b32.xlu0 %v838, 48
        %v1629 = vpop.permute.xlu0 %1628
        %1630 = vrot.lane.b32.xlu0 %v839, 48
        %v1631 = vpop.permute.xlu0 %1630
        %1632 = vrot.lane.b32.xlu0 %v840, 48
        %v1633 = vpop.permute.xlu0 %1632
        %1634 = vrot.lane.b32.xlu0 %v841, 48
        %v1635 = vpop.permute.xlu0 %1634
        %1636 = vrot.lane.b32.xlu0 %v842, 48
        %v1637 = vpop.permute.xlu0 %1636
        %1638 = vrot.lane.b32.xlu0 %v843, 48
        %v1639 = vpop.permute.xlu0 %1638
        %1640 = vrot.lane.b32.xlu0 %v844, 48
        %v1641 = vpop.permute.xlu0 %1640
        %1642 = vrot.lane.b32.xlu0 %v845, 48
        %v1643 = vpop.permute.xlu0 %1642
        %1644 = vrot.lane.b32.xlu0 %v846, 48
        %v1645 = vpop.permute.xlu0 %1644
        %1646 = vrot.lane.b32.xlu0 %v847, 48
        %v1647 = vpop.permute.xlu0 %1646
        %1712 = vrot.lane.b32.xlu0 %v848, 56
        %v1713 = vpop.permute.xlu0 %1712
        %1714 = vrot.lane.b32.xlu0 %v849, 56
        %v1715 = vpop.permute.xlu0 %1714
        %1716 = vrot.lane.b32.xlu0 %v850, 56
        %v1717 = vpop.permute.xlu0 %1716
        %1718 = vrot.lane.b32.xlu0 %v851, 56
        %v1719 = vpop.permute.xlu0 %1718
        %1720 = vrot.lane.b32.xlu0 %v852, 56
        %v1721 = vpop.permute.xlu0 %1720
        %1722 = vrot.lane.b32.xlu0 %v853, 56
        %v1723 = vpop.permute.xlu0 %1722
        %1724 = vrot.lane.b32.xlu0 %v854, 56
        %v1725 = vpop.permute.xlu0 %1724
        %1726 = vrot.lane.b32.xlu0 %v855, 56
        %v1727 = vpop.permute.xlu0 %1726
        %1728 = vrot.lane.b32.xlu0 %v856, 56
        %v1729 = vpop.permute.xlu0 %1728
        %1730 = vrot.lane.b32.xlu0 %v857, 56
        %v1731 = vpop.permute.xlu0 %1730
        %1732 = vrot.lane.b32.xlu0 %v858, 56
        %v1733 = vpop.permute.xlu0 %1732
        %1734 = vrot.lane.b32.xlu0 %v859, 56
        %v1735 = vpop.permute.xlu0 %1734
        %1736 = vrot.lane.b32.xlu0 %v860, 56
        %v1737 = vpop.permute.xlu0 %1736
        %1738 = vrot.lane.b32.xlu0 %v861, 56
        %v1739 = vpop.permute.xlu0 %1738
        %1740 = vrot.lane.b32.xlu0 %v862, 56
        %v1741 = vpop.permute.xlu0 %1740
        %1742 = vrot.lane.b32.xlu0 %v863, 56
        %v1743 = vpop.permute.xlu0 %1742
        %1744 = vrot.lane.b32.xlu0 %v864, 56
        %v1745 = vpop.permute.xlu0 %1744
        %1746 = vrot.lane.b32.xlu0 %v865, 56
        %v1747 = vpop.permute.xlu0 %1746
        %1748 = vrot.lane.b32.xlu0 %v866, 56
        %v1749 = vpop.permute.xlu0 %1748
        %1750 = vrot.lane.b32.xlu0 %v867, 56
        %v1751 = vpop.permute.xlu0 %1750
        %1752 = vrot.lane.b32.xlu0 %v868, 56
        %v1753 = vpop.permute.xlu0 %1752
        %1754 = vrot.lane.b32.xlu0 %v869, 56
        %v1755 = vpop.permute.xlu0 %1754
        %1756 = vrot.lane.b32.xlu0 %v870, 56
        %v1757 = vpop.permute.xlu0 %1756
        %1758 = vrot.lane.b32.xlu0 %v871, 56
        %v1759 = vpop.permute.xlu0 %1758
        %1760 = vrot.lane.b32.xlu0 %v872, 56
        %v1761 = vpop.permute.xlu0 %1760
        %1762 = vrot.lane.b32.xlu0 %v873, 56
        %v1763 = vpop.permute.xlu0 %1762
        %1764 = vrot.lane.b32.xlu0 %v874, 56
        %v1765 = vpop.permute.xlu0 %1764
        %1766 = vrot.lane.b32.xlu0 %v875, 56
        %v1767 = vpop.permute.xlu0 %1766
        %1768 = vrot.lane.b32.xlu0 %v876, 56
        %v1769 = vpop.permute.xlu0 %1768
        %1770 = vrot.lane.b32.xlu0 %v877, 56
        %v1771 = vpop.permute.xlu0 %1770
        %1772 = vrot.lane.b32.xlu0 %v878, 56
        %v1773 = vpop.permute.xlu0 %1772
        %1774 = vrot.lane.b32.xlu0 %v879, 56
        %v1775 = vpop.permute.xlu0 %1774
        %1840 = vrot.lane.b32.xlu0 %v880, 64
        %v1841 = vpop.permute.xlu0 %1840
        %1842 = vrot.lane.b32.xlu0 %v881, 64
        %v1843 = vpop.permute.xlu0 %1842
        %1844 = vrot.lane.b32.xlu0 %v882, 64
        %v1845 = vpop.permute.xlu0 %1844
        %1846 = vrot.lane.b32.xlu0 %v883, 64
        %v1847 = vpop.permute.xlu0 %1846
        %1848 = vrot.lane.b32.xlu0 %v884, 64
        %v1849 = vpop.permute.xlu0 %1848
        %1850 = vrot.lane.b32.xlu0 %v885, 64
        %v1851 = vpop.permute.xlu0 %1850
        %1852 = vrot.lane.b32.xlu0 %v886, 64
        %v1853 = vpop.permute.xlu0 %1852
        %1854 = vrot.lane.b32.xlu0 %v887, 64
        %v1855 = vpop.permute.xlu0 %1854
        %1856 = vrot.lane.b32.xlu0 %v888, 64
        %v1857 = vpop.permute.xlu0 %1856
        %1858 = vrot.lane.b32.xlu0 %v889, 64
        %v1859 = vpop.permute.xlu0 %1858
        %1860 = vrot.lane.b32.xlu0 %v890, 64
        %v1861 = vpop.permute.xlu0 %1860
        %1862 = vrot.lane.b32.xlu0 %v891, 64
        %v1863 = vpop.permute.xlu0 %1862
        %1864 = vrot.lane.b32.xlu0 %v892, 64
        %v1865 = vpop.permute.xlu0 %1864
        %1866 = vrot.lane.b32.xlu0 %v893, 64
        %v1867 = vpop.permute.xlu0 %1866
        %1868 = vrot.lane.b32.xlu0 %v894, 64
        %v1869 = vpop.permute.xlu0 %1868
        %1870 = vrot.lane.b32.xlu0 %v895, 64
        %v1871 = vpop.permute.xlu0 %1870
        %1872 = vrot.lane.b32.xlu0 %v896, 64
        %v1873 = vpop.permute.xlu0 %1872
        %1874 = vrot.lane.b32.xlu0 %v897, 64
        %v1875 = vpop.permute.xlu0 %1874
        %1876 = vrot.lane.b32.xlu0 %v898, 64
        %v1877 = vpop.permute.xlu0 %1876
        %1878 = vrot.lane.b32.xlu0 %v899, 64
        %v1879 = vpop.permute.xlu0 %1878
        %1880 = vrot.lane.b32.xlu0 %v900, 64
        %v1881 = vpop.permute.xlu0 %1880
        %1882 = vrot.lane.b32.xlu0 %v901, 64
        %v1883 = vpop.permute.xlu0 %1882
        %1884 = vrot.lane.b32.xlu0 %v902, 64
        %v1885 = vpop.permute.xlu0 %1884
        %1886 = vrot.lane.b32.xlu0 %v903, 64
        %v1887 = vpop.permute.xlu0 %1886
        %1888 = vrot.lane.b32.xlu0 %v904, 64
        %v1889 = vpop.permute.xlu0 %1888
        %1890 = vrot.lane.b32.xlu0 %v905, 64
        %v1891 = vpop.permute.xlu0 %1890
        %1892 = vrot.lane.b32.xlu0 %v906, 64
        %v1893 = vpop.permute.xlu0 %1892
        %1894 = vrot.lane.b32.xlu0 %v907, 64
        %v1895 = vpop.permute.xlu0 %1894
        %1896 = vrot.lane.b32.xlu0 %v908, 64
        %v1897 = vpop.permute.xlu0 %1896
        %1898 = vrot.lane.b32.xlu0 %v909, 64
        %v1899 = vpop.permute.xlu0 %1898
        %1900 = vrot.lane.b32.xlu0 %v910, 64
        %v1901 = vpop.permute.xlu0 %1900
        %1902 = vrot.lane.b32.xlu0 %v911, 64
        %v1903 = vpop.permute.xlu0 %1902
        %v1936 = vsel %vm527, %v623, %v945
        %v1937 = vsel %vm527, %v624, %v947
        %v1938 = vsel %vm527, %v625, %v949
        %v1939 = vsel %vm527, %v626, %v951
        %v1940 = vsel %vm527, %v627, %v953
        %v1941 = vsel %vm527, %v628, %v955
        %v1942 = vsel %vm527, %v629, %v957
        %v1943 = vsel %vm527, %v630, %v959
        %v1944 = vsel %vm527, %v631, %v961
        %v1945 = vsel %vm527, %v632, %v963
        %v1946 = vsel %vm527, %v633, %v965
        %v1947 = vsel %vm527, %v634, %v967
        %v1948 = vsel %vm527, %v635, %v969
        %v1949 = vsel %vm527, %v636, %v971
        %v1950 = vsel %vm527, %v637, %v973
        %v1951 = vsel %vm527, %v638, %v975
        %v1952 = vsel %vm527, %v639, %v977
        %v1953 = vsel %vm527, %v640, %v979
        %v1954 = vsel %vm527, %v641, %v981
        %v1955 = vsel %vm527, %v642, %v983
        %v1956 = vsel %vm527, %v643, %v985
        %v1957 = vsel %vm527, %v644, %v987
        %v1958 = vsel %vm527, %v645, %v989
        %v1959 = vsel %vm527, %v646, %v991
        %v1960 = vsel %vm527, %v647, %v993
        %v1961 = vsel %vm527, %v648, %v995
        %v1962 = vsel %vm527, %v649, %v997
        %v1963 = vsel %vm527, %v650, %v999
        %v1964 = vsel %vm527, %v651, %v1001
        %v1965 = vsel %vm527, %v652, %v1003
        %v1966 = vsel %vm527, %v653, %v1005
        %v1967 = vsel %vm527, %v654, %v1007
        %vm1968 = vcmask 130048
        %v1969 = vsel %vm1968, %v1936, %v1073
        %v1970 = vsel %vm1968, %v1937, %v1075
        %v1971 = vsel %vm1968, %v1938, %v1077
        %v1972 = vsel %vm1968, %v1939, %v1079
        %v1973 = vsel %vm1968, %v1940, %v1081
        %v1974 = vsel %vm1968, %v1941, %v1083
        %v1975 = vsel %vm1968, %v1942, %v1085
        %v1976 = vsel %vm1968, %v1943, %v1087
        %v1977 = vsel %vm1968, %v1944, %v1089
        %v1978 = vsel %vm1968, %v1945, %v1091
        %v1979 = vsel %vm1968, %v1946, %v1093
        %v1980 = vsel %vm1968, %v1947, %v1095
        %v1981 = vsel %vm1968, %v1948, %v1097
        %v1982 = vsel %vm1968, %v1949, %v1099
        %v1983 = vsel %vm1968, %v1950, %v1101
        %v1984 = vsel %vm1968, %v1951, %v1103
        %v1985 = vsel %vm1968, %v1952, %v1105
        %v1986 = vsel %vm1968, %v1953, %v1107
        %v1987 = vsel %vm1968, %v1954, %v1109
        %v1988 = vsel %vm1968, %v1955, %v1111
        %v1989 = vsel %vm1968, %v1956, %v1113
        %v1990 = vsel %vm1968, %v1957, %v1115
        %v1991 = vsel %vm1968, %v1958, %v1117
        %v1992 = vsel %vm1968, %v1959, %v1119
        %v1993 = vsel %vm1968, %v1960, %v1121
        %v1994 = vsel %vm1968, %v1961, %v1123
        %v1995 = vsel %vm1968, %v1962, %v1125
        %v1996 = vsel %vm1968, %v1963, %v1127
        %v1997 = vsel %vm1968, %v1964, %v1129
        %v1998 = vsel %vm1968, %v1965, %v1131
        %v1999 = vsel %vm1968, %v1966, %v1133
        %v2000 = vsel %vm1968, %v1967, %v1135
        %vm2001 = vcmask 195584
        %v2002 = vsel %vm2001, %v1969, %v1201
        %v2003 = vsel %vm2001, %v1970, %v1203
        %v2004 = vsel %vm2001, %v1971, %v1205
        %v2005 = vsel %vm2001, %v1972, %v1207
        %v2006 = vsel %vm2001, %v1973, %v1209
        %v2007 = vsel %vm2001, %v1974, %v1211
        %v2008 = vsel %vm2001, %v1975, %v1213
        %v2009 = vsel %vm2001, %v1976, %v1215
        %v2010 = vsel %vm2001, %v1977, %v1217
        %v2011 = vsel %vm2001, %v1978, %v1219
        %v2012 = vsel %vm2001, %v1979, %v1221
        %v2013 = vsel %vm2001, %v1980, %v1223
        %v2014 = vsel %vm2001, %v1981, %v1225
        %v2015 = vsel %vm2001, %v1982, %v1227
        %v2016 = vsel %vm2001, %v1983, %v1229
        %v2017 = vsel %vm2001, %v1984, %v1231
        %v2018 = vsel %vm2001, %v1985, %v1233
        %v2019 = vsel %vm2001, %v1986, %v1235
        %v2020 = vsel %vm2001, %v1987, %v1237
        %v2021 = vsel %vm2001, %v1988, %v1239
        %v2022 = vsel %vm2001, %v1989, %v1241
        %v2023 = vsel %vm2001, %v1990, %v1243
        %v2024 = vsel %vm2001, %v1991, %v1245
        %v2025 = vsel %vm2001, %v1992, %v1247
        %v2026 = vsel %vm2001, %v1993, %v1249
        %v2027 = vsel %vm2001, %v1994, %v1251
        %v2028 = vsel %vm2001, %v1995, %v1253
        %v2029 = vsel %vm2001, %v1996, %v1255
        %v2030 = vsel %vm2001, %v1997, %v1257
        %v2031 = vsel %vm2001, %v1998, %v1259
        %v2032 = vsel %vm2001, %v1999, %v1261
        %v2033 = vsel %vm2001, %v2000, %v1263
        %vm2034 = vcmask 261120
        %v2035 = vsel %vm2034, %v2002, %v1329
        %v2036 = vsel %vm2034, %v2003, %v1331
        %v2037 = vsel %vm2034, %v2004, %v1333
        %v2038 = vsel %vm2034, %v2005, %v1335
        %v2039 = vsel %vm2034, %v2006, %v1337
        %v2040 = vsel %vm2034, %v2007, %v1339
        %v2041 = vsel %vm2034, %v2008, %v1341
        %v2042 = vsel %vm2034, %v2009, %v1343
        %v2043 = vsel %vm2034, %v2010, %v1345
        %v2044 = vsel %vm2034, %v2011, %v1347
        %v2045 = vsel %vm2034, %v2012, %v1349
        %v2046 = vsel %vm2034, %v2013, %v1351
        %v2047 = vsel %vm2034, %v2014, %v1353
        %v2048 = vsel %vm2034, %v2015, %v1355
        %v2049 = vsel %vm2034, %v2016, %v1357
        %v2050 = vsel %vm2034, %v2017, %v1359
        %v2051 = vsel %vm2034, %v2018, %v1361
        %v2052 = vsel %vm2034, %v2019, %v1363
        %v2053 = vsel %vm2034, %v2020, %v1365
        %v2054 = vsel %vm2034, %v2021, %v1367
        %v2055 = vsel %vm2034, %v2022, %v1369
        %v2056 = vsel %vm2034, %v2023, %v1371
        %v2057 = vsel %vm2034, %v2024, %v1373
        %v2058 = vsel %vm2034, %v2025, %v1375
        %v2059 = vsel %vm2034, %v2026, %v1377
        %v2060 = vsel %vm2034, %v2027, %v1379
        %v2061 = vsel %vm2034, %v2028, %v1381
        %v2062 = vsel %vm2034, %v2029, %v1383
        %v2063 = vsel %vm2034, %v2030, %v1385
        %v2064 = vsel %vm2034, %v2031, %v1387
        %v2065 = vsel %vm2034, %v2032, %v1389
        %v2066 = vsel %vm2034, %v2033, %v1391
        %vm2067 = vcmask 326656
        %v2068 = vsel %vm2067, %v2035, %v1457
        %v2069 = vsel %vm2067, %v2036, %v1459
        %v2070 = vsel %vm2067, %v2037, %v1461
        %v2071 = vsel %vm2067, %v2038, %v1463
        %v2072 = vsel %vm2067, %v2039, %v1465
        %v2073 = vsel %vm2067, %v2040, %v1467
        %v2074 = vsel %vm2067, %v2041, %v1469
        %v2075 = vsel %vm2067, %v2042, %v1471
        %v2076 = vsel %vm2067, %v2043, %v1473
        %v2077 = vsel %vm2067, %v2044, %v1475
        %v2078 = vsel %vm2067, %v2045, %v1477
        %v2079 = vsel %vm2067, %v2046, %v1479
        %v2080 = vsel %vm2067, %v2047, %v1481
        %v2081 = vsel %vm2067, %v2048, %v1483
        %v2082 = vsel %vm2067, %v2049, %v1485
        %v2083 = vsel %vm2067, %v2050, %v1487
        %v2084 = vsel %vm2067, %v2051, %v1489
        %v2085 = vsel %vm2067, %v2052, %v1491
        %v2086 = vsel %vm2067, %v2053, %v1493
        %v2087 = vsel %vm2067, %v2054, %v1495
        %v2088 = vsel %vm2067, %v2055, %v1497
        %v2089 = vsel %vm2067, %v2056, %v1499
        %v2090 = vsel %vm2067, %v2057, %v1501
        %v2091 = vsel %vm2067, %v2058, %v1503
        %v2092 = vsel %vm2067, %v2059, %v1505
        %v2093 = vsel %vm2067, %v2060, %v1507
        %v2094 = vsel %vm2067, %v2061, %v1509
        %v2095 = vsel %vm2067, %v2062, %v1511
        %v2096 = vsel %vm2067, %v2063, %v1513
        %v2097 = vsel %vm2067, %v2064, %v1515
        %v2098 = vsel %vm2067, %v2065, %v1517
        %v2099 = vsel %vm2067, %v2066, %v1519
        %vm2100 = vcmask 392192
        %v2101 = vsel %vm2100, %v2068, %v1585
        %v2102 = vsel %vm2100, %v2069, %v1587
        %v2103 = vsel %vm2100, %v2070, %v1589
        %v2104 = vsel %vm2100, %v2071, %v1591
        %v2105 = vsel %vm2100, %v2072, %v1593
        %v2106 = vsel %vm2100, %v2073, %v1595
        %v2107 = vsel %vm2100, %v2074, %v1597
        %v2108 = vsel %vm2100, %v2075, %v1599
        %v2109 = vsel %vm2100, %v2076, %v1601
        %v2110 = vsel %vm2100, %v2077, %v1603
        %v2111 = vsel %vm2100, %v2078, %v1605
        %v2112 = vsel %vm2100, %v2079, %v1607
        %v2113 = vsel %vm2100, %v2080, %v1609
        %v2114 = vsel %vm2100, %v2081, %v1611
        %v2115 = vsel %vm2100, %v2082, %v1613
        %v2116 = vsel %vm2100, %v2083, %v1615
        %v2117 = vsel %vm2100, %v2084, %v1617
        %v2118 = vsel %vm2100, %v2085, %v1619
        %v2119 = vsel %vm2100, %v2086, %v1621
        %v2120 = vsel %vm2100, %v2087, %v1623
        %v2121 = vsel %vm2100, %v2088, %v1625
        %v2122 = vsel %vm2100, %v2089, %v1627
        %v2123 = vsel %vm2100, %v2090, %v1629
        %v2124 = vsel %vm2100, %v2091, %v1631
        %v2125 = vsel %vm2100, %v2092, %v1633
        %v2126 = vsel %vm2100, %v2093, %v1635
        %v2127 = vsel %vm2100, %v2094, %v1637
        %v2128 = vsel %vm2100, %v2095, %v1639
        %v2129 = vsel %vm2100, %v2096, %v1641
        %v2130 = vsel %vm2100, %v2097, %v1643
        %v2131 = vsel %vm2100, %v2098, %v1645
        %v2132 = vsel %vm2100, %v2099, %v1647
        %vm2133 = vcmask 457728
        %v2134 = vsel %vm2133, %v2101, %v1713
        %v2135 = vsel %vm2133, %v2102, %v1715
        %v2136 = vsel %vm2133, %v2103, %v1717
        %v2137 = vsel %vm2133, %v2104, %v1719
        %v2138 = vsel %vm2133, %v2105, %v1721
        %v2139 = vsel %vm2133, %v2106, %v1723
        %v2140 = vsel %vm2133, %v2107, %v1725
        %v2141 = vsel %vm2133, %v2108, %v1727
        %v2142 = vsel %vm2133, %v2109, %v1729
        %v2143 = vsel %vm2133, %v2110, %v1731
        %v2144 = vsel %vm2133, %v2111, %v1733
        %v2145 = vsel %vm2133, %v2112, %v1735
        %v2146 = vsel %vm2133, %v2113, %v1737
        %v2147 = vsel %vm2133, %v2114, %v1739
        %v2148 = vsel %vm2133, %v2115, %v1741
        %v2149 = vsel %vm2133, %v2116, %v1743
        %v2150 = vsel %vm2133, %v2117, %v1745
        %v2151 = vsel %vm2133, %v2118, %v1747
        %v2152 = vsel %vm2133, %v2119, %v1749
        %v2153 = vsel %vm2133, %v2120, %v1751
        %v2154 = vsel %vm2133, %v2121, %v1753
        %v2155 = vsel %vm2133, %v2122, %v1755
        %v2156 = vsel %vm2133, %v2123, %v1757
        %v2157 = vsel %vm2133, %v2124, %v1759
        %v2158 = vsel %vm2133, %v2125, %v1761
        %v2159 = vsel %vm2133, %v2126, %v1763
        %v2160 = vsel %vm2133, %v2127, %v1765
        %v2161 = vsel %vm2133, %v2128, %v1767
        %v2162 = vsel %vm2133, %v2129, %v1769
        %v2163 = vsel %vm2133, %v2130, %v1771
        %v2164 = vsel %vm2133, %v2131, %v1773
        %v2165 = vsel %vm2133, %v2132, %v1775
        %vm2166 = vcmask 523264
        %v2167 = vsel %vm2166, %v2134, %v1841
        %v2168 = vsel %vm2166, %v2135, %v1843
        %v2169 = vsel %vm2166, %v2136, %v1845
        %v2170 = vsel %vm2166, %v2137, %v1847
        %v2171 = vsel %vm2166, %v2138, %v1849
        %v2172 = vsel %vm2166, %v2139, %v1851
        %v2173 = vsel %vm2166, %v2140, %v1853
        %v2174 = vsel %vm2166, %v2141, %v1855
        %v2175 = vsel %vm2166, %v2142, %v1857
        %v2176 = vsel %vm2166, %v2143, %v1859
        %v2177 = vsel %vm2166, %v2144, %v1861
        %v2178 = vsel %vm2166, %v2145, %v1863
        %v2179 = vsel %vm2166, %v2146, %v1865
        %v2180 = vsel %vm2166, %v2147, %v1867
        %v2181 = vsel %vm2166, %v2148, %v1869
        %v2182 = vsel %vm2166, %v2149, %v1871
        %v2183 = vsel %vm2166, %v2150, %v1873
        %v2184 = vsel %vm2166, %v2151, %v1875
        %v2185 = vsel %vm2166, %v2152, %v1877
        %v2186 = vsel %vm2166, %v2153, %v1879
        %v2187 = vsel %vm2166, %v2154, %v1881
        %v2188 = vsel %vm2166, %v2155, %v1883
        %v2189 = vsel %vm2166, %v2156, %v1885
        %v2190 = vsel %vm2166, %v2157, %v1887
        %v2191 = vsel %vm2166, %v2158, %v1889
        %v2192 = vsel %vm2166, %v2159, %v1891
        %v2193 = vsel %vm2166, %v2160, %v1893
        %v2194 = vsel %vm2166, %v2161, %v1895
        %v2195 = vsel %vm2166, %v2162, %v1897
        %v2196 = vsel %vm2166, %v2163, %v1899
        %v2197 = vsel %vm2166, %v2164, %v1901
        %v2198 = vsel %vm2166, %v2165, %v1903
        %v2199 = vld [vmem:[%s3] sm:$0xff]
        %v2200 = vld [vmem:[%s3 + $0x8] sm:$0xff]
        %v2201 = vld [vmem:[%s3 + $0x10] sm:$0xff]
        %v2202 = vld [vmem:[%s3 + $0x18] sm:$0xff]
        %v2203 = vld [vmem:[%s3 + $0x20] sm:$0xff]
        %v2204 = vld [vmem:[%s3 + $0x28] sm:$0xff]
        %v2205 = vld [vmem:[%s3 + $0x30] sm:$0xff]
        %v2206 = vld [vmem:[%s3 + $0x38] sm:$0xff]
        %v2207 = vld [vmem:[%s3 + $0x40] sm:$0xff]
        %vm2208 = vcmask 588800
        %v2210 = vsel %vm2208, %v2167, 0
        %v2213 = vsel %vm2208, %v2168, 0
        %v2216 = vsel %vm2208, %v2169, 0
        %v2219 = vsel %vm2208, %v2170, 0
        %v2222 = vsel %vm2208, %v2171, 0
        %v2225 = vsel %vm2208, %v2172, 0
        %v2228 = vsel %vm2208, %v2173, 0
        %v2231 = vsel %vm2208, %v2174, 0
        %v2234 = vsel %vm2208, %v2175, 0
        %v2237 = vsel %vm2208, %v2176, 0
        %v2240 = vsel %vm2208, %v2177, 0
        %v2243 = vsel %vm2208, %v2178, 0
        %v2246 = vsel %vm2208, %v2179, 0
        %v2249 = vsel %vm2208, %v2180, 0
        %v2252 = vsel %vm2208, %v2181, 0
        %v2255 = vsel %vm2208, %v2182, 0
        %v2258 = vsel %vm2208, %v2183, 0
        %v2261 = vsel %vm2208, %v2184, 0
        %v2264 = vsel %vm2208, %v2185, 0
        %v2267 = vsel %vm2208, %v2186, 0
        %v2270 = vsel %vm2208, %v2187, 0
        %v2273 = vsel %vm2208, %v2188, 0
        %v2276 = vsel %vm2208, %v2189, 0
        %v2279 = vsel %vm2208, %v2190, 0
        %v2282 = vsel %vm2208, %v2191, 0
        %v2285 = vsel %vm2208, %v2192, 0
        %v2288 = vsel %vm2208, %v2193, 0
        %v2291 = vsel %vm2208, %v2194, 0
        %v2294 = vsel %vm2208, %v2195, 0
        %v2297 = vsel %vm2208, %v2196, 0
        %v2300 = vsel %vm2208, %v2197, 0
        %v2303 = vsel %vm2208, %v2198, 0
        %2305 = vmatprep.subr.mxu0 0.0
        %2306 = vmatpush1.msra.mxu0 %v2199
        %2307 = vmatprep.subr.mxu0 0.0
        %2308 = vmatpush1.msra.mxu0 %v2200
        %2309 = vmatprep.subr.mxu0 0.0
        %2310 = vmatpush1.msra.mxu0 %v2201
        %2311 = vmatprep.subr.mxu0 0.0
        %2312 = vmatpush1.msra.mxu0 %v2202
        %2313 = vmatprep.subr.mxu0 0.0
        %2314 = vmatpush1.msra.mxu0 %v2203
        %2315 = vmatprep.subr.mxu0 0.0
        %2316 = vmatpush1.msra.mxu0 %v2204
        %2317 = vmatprep.subr.mxu0 0.0
        %2318 = vmatpush1.msra.mxu0 %v2205
        %2319 = vmatprep.subr.mxu0 0.0
        %2320 = vmatpush1.msra.mxu0 %v2206
        %2321 = vmatprep.subr.mxu0 0.0
        %2322 = vmatpush1.msra.mxu0 %v2207
        %2323 = vmatprep.subr.mxu0 0.0
        %2324 = vmatpush1.msra.mxu0 0.0
        %2325 = vmatprep.subr.mxu0 0.0
        %2326 = vmatpush1.msra.mxu0 0.0
        %2327 = vmatprep.subr.mxu0 0.0
        %2328 = vmatpush1.msra.mxu0 0.0
        %2329 = vmatprep.subr.mxu0 0.0
        %2330 = vmatpush1.msra.mxu0 0.0
        %2331 = vmatprep.subr.mxu0 0.0
        %2332 = vmatpush1.msra.mxu0 0.0
        %2333 = vmatprep.subr.mxu0 0.0
        %2334 = vmatpush1.msra.mxu0 0.0
        %2335 = vmatprep.subr.mxu0 0.0
        %2336 = vmatpush1.msra.mxu0 0.0
        %2337 = vmatprep.subr.mxu0 0.0
        %2338 = vmatpush1.msra.mxu0 0.0
        %2339 = vmatprep.subr.mxu0 0.0
        %2340 = vmatpush1.msra.mxu0 0.0
        %2341 = vmatprep.subr.mxu0 0.0
        %2342 = vmatpush1.msra.mxu0 0.0
        %2343 = vmatprep.subr.mxu0 0.0
        %2344 = vmatpush1.msra.mxu0 0.0
        %2345 = vmatprep.subr.mxu0 0.0
        %2346 = vmatpush1.msra.mxu0 0.0
        %2347 = vmatprep.subr.mxu0 0.0
        %2348 = vmatpush1.msra.mxu0 0.0
        %2349 = vmatprep.subr.mxu0 0.0
        %2350 = vmatpush1.msra.mxu0 0.0
        %2351 = vmatprep.subr.mxu0 0.0
        %2352 = vmatpush1.msra.mxu0 0.0
        %2353 = vmatprep.subr.mxu0 0.0
        %2354 = vmatpush1.msra.mxu0 0.0
        %2355 = vmatprep.subr.mxu0 0.0
        %2356 = vmatpush1.msra.mxu0 0.0
        %2357 = vmatprep.subr.mxu0 0.0
        %2358 = vmatpush1.msra.mxu0 0.0
        %2359 = vmatprep.subr.mxu0 0.0
        %2360 = vmatpush1.msra.mxu0 0.0
        %2361 = vmatprep.subr.mxu0 0.0
        %2362 = vmatpush1.msra.mxu0 0.0
        %2363 = vmatprep.subr.mxu0 0.0
        %2364 = vmatpush1.msra.mxu0 0.0
        %2365 = vmatprep.subr.mxu0 0.0
        %2366 = vmatpush1.msra.mxu0 0.0
        %2367 = vmatprep.subr.mxu0 0.0
        %2368 = vmatpush1.msra.mxu0 0.0
        %2369 = vmatprep.mubr.f32.mxu0 0.0
        %2370 = vmatmul.mubr.f32.gmra.mrb[0].mxu0 %v2210
        %v2371 = vpop.f32.mrb[0].mxu0
        %v2372 = vadd.f32 0.0, %v2371
        %v2373 = vpop.f32.mrb[0].mxu0
        %2374 = vmatprep.mubr.f32.mxu0 0.0
        %2375 = vmatmul.mubr.f32.gmra.mrb[0].mxu0 %v2213
        %v2376 = vpop.f32.mrb[0].mxu0
        %v2377 = vadd.f32 0.0, %v2376
        %v2378 = vpop.f32.mrb[0].mxu0
        %2379 = vmatprep.mubr.f32.mxu0 0.0
        %2380 = vmatmul.mubr.f32.gmra.mrb[0].mxu0 %v2216
        %v2381 = vpop.f32.mrb[0].mxu0
        %v2382 = vadd.f32 0.0, %v2381
        %v2383 = vpop.f32.mrb[0].mxu0
        %2384 = vmatprep.mubr.f32.mxu0 0.0
        %2385 = vmatmul.mubr.f32.gmra.mrb[0].mxu0 %v2219
        %v2386 = vpop.f32.mrb[0].mxu0
        %v2387 = vadd.f32 0.0, %v2386
        %v2388 = vpop.f32.mrb[0].mxu0
        %2389 = vmatprep.mubr.f32.mxu0 0.0
        %2390 = vmatmul.mubr.f32.gmra.mrb[0].mxu0 %v2222
        %v2391 = vpop.f32.mrb[0].mxu0
        %v2392 = vadd.f32 0.0, %v2391
        %v2393 = vpop.f32.mrb[0].mxu0
        %2394 = vmatprep.mubr.f32.mxu0 0.0
        %2395 = vmatmul.mubr.f32.gmra.mrb[0].mxu0 %v2225
        %v2396 = vpop.f32.mrb[0].mxu0
        %v2397 = vadd.f32 0.0, %v2396
        %v2398 = vpop.f32.mrb[0].mxu0
        %2399 = vmatprep.mubr.f32.mxu0 0.0
        %2400 = vmatmul.mubr.f32.gmra.mrb[0].mxu0 %v2228
        %v2401 = vpop.f32.mrb[0].mxu0
        %v2402 = vadd.f32 0.0, %v2401
        %v2403 = vpop.f32.mrb[0].mxu0
        %2404 = vmatprep.mubr.f32.mxu0 0.0
        %2405 = vmatmul.mubr.f32.gmra.mrb[0].mxu0 %v2231
        %v2406 = vpop.f32.mrb[0].mxu0
        %v2407 = vadd.f32 0.0, %v2406
        %v2408 = vpop.f32.mrb[0].mxu0
        %2409 = vmatprep.mubr.f32.mxu0 0.0
        %2410 = vmatmul.mubr.f32.gmra.mrb[0].mxu0 %v2234
        %v2411 = vpop.f32.mrb[0].mxu0
        %v2412 = vadd.f32 0.0, %v2411
        %v2413 = vpop.f32.mrb[0].mxu0
        %2414 = vmatprep.mubr.f32.mxu0 0.0
        %2415 = vmatmul.mubr.f32.gmra.mrb[0].mxu0 %v2237
        %v2416 = vpop.f32.mrb[0].mxu0
        %v2417 = vadd.f32 0.0, %v2416
        %v2418 = vpop.f32.mrb[0].mxu0
        %2419 = vmatprep.mubr.f32.mxu0 0.0
        %2420 = vmatmul.mubr.f32.gmra.mrb[0].mxu0 %v2240
        %v2421 = vpop.f32.mrb[0].mxu0
        %v2422 = vadd.f32 0.0, %v2421
        %v2423 = vpop.f32.mrb[0].mxu0
        %2424 = vmatprep.mubr.f32.mxu0 0.0
        %2425 = vmatmul.mubr.f32.gmra.mrb[0].mxu0 %v2243
        %v2426 = vpop.f32.mrb[0].mxu0
        %v2427 = vadd.f32 0.0, %v2426
        %v2428 = vpop.f32.mrb[0].mxu0
        %2429 = vmatprep.mubr.f32.mxu0 0.0
        %2430 = vmatmul.mubr.f32.gmra.mrb[0].mxu0 %v2246
        %v2431 = vpop.f32.mrb[0].mxu0
        %v2432 = vadd.f32 0.0, %v2431
        %v2433 = vpop.f32.mrb[0].mxu0
        %2434 = vmatprep.mubr.f32.mxu0 0.0
        %2435 = vmatmul.mubr.f32.gmra.mrb[0].mxu0 %v2249
        %v2436 = vpop.f32.mrb[0].mxu0
        %v2437 = vadd.f32 0.0, %v2436
        %v2438 = vpop.f32.mrb[0].mxu0
        %2439 = vmatprep.mubr.f32.mxu0 0.0
        %2440 = vmatmul.mubr.f32.gmra.mrb[0].mxu0 %v2252
        %v2441 = vpop.f32.mrb[0].mxu0
        %v2442 = vadd.f32 0.0, %v2441
        %v2443 = vpop.f32.mrb[0].mxu0
        %2444 = vmatprep.mubr.f32.mxu0 0.0
        %2445 = vmatmul.mubr.f32.gmra.mrb[0].mxu0 %v2255
        %v2446 = vpop.f32.mrb[0].mxu0
        %v2447 = vadd.f32 0.0, %v2446
        %v2448 = vpop.f32.mrb[0].mxu0
        %2449 = vmatprep.mubr.f32.mxu0 0.0
        %2450 = vmatmul.mubr.f32.gmra.mrb[0].mxu0 %v2258
        %v2451 = vpop.f32.mrb[0].mxu0
        %v2452 = vadd.f32 0.0, %v2451
        %v2453 = vpop.f32.mrb[0].mxu0
        %2454 = vmatprep.mubr.f32.mxu0 0.0
        %2455 = vmatmul.mubr.f32.gmra.mrb[0].mxu0 %v2261
        %v2456 = vpop.f32.mrb[0].mxu0
        %v2457 = vadd.f32 0.0, %v2456
        %v2458 = vpop.f32.mrb[0].mxu0
        %2459 = vmatprep.mubr.f32.mxu0 0.0
        %2460 = vmatmul.mubr.f32.gmra.mrb[0].mxu0 %v2264
        %v2461 = vpop.f32.mrb[0].mxu0
        %v2462 = vadd.f32 0.0, %v2461
        %v2463 = vpop.f32.mrb[0].mxu0
        %2464 = vmatprep.mubr.f32.mxu0 0.0
        %2465 = vmatmul.mubr.f32.gmra.mrb[0].mxu0 %v2267
        %v2466 = vpop.f32.mrb[0].mxu0
        %v2467 = vadd.f32 0.0, %v2466
        %v2468 = vpop.f32.mrb[0].mxu0
        %2469 = vmatprep.mubr.f32.mxu0 0.0
        %2470 = vmatmul.mubr.f32.gmra.mrb[0].mxu0 %v2270
        %v2471 = vpop.f32.mrb[0].mxu0
        %v2472 = vadd.f32 0.0, %v2471
        %v2473 = vpop.f32.mrb[0].mxu0
        %2474 = vmatprep.mubr.f32.mxu0 0.0
        %2475 = vmatmul.mubr.f32.gmra.mrb[0].mxu0 %v2273
        %v2476 = vpop.f32.mrb[0].mxu0
        %v2477 = vadd.f32 0.0, %v2476
        %v2478 = vpop.f32.mrb[0].mxu0
        %2479 = vmatprep.mubr.f32.mxu0 0.0
        %2480 = vmatmul.mubr.f32.gmra.mrb[0].mxu0 %v2276
        %v2481 = vpop.f32.mrb[0].mxu0
        %v2482 = vadd.f32 0.0, %v2481
        %v2483 = vpop.f32.mrb[0].mxu0
        %2484 = vmatprep.mubr.f32.mxu0 0.0
        %2485 = vmatmul.mubr.f32.gmra.mrb[0].mxu0 %v2279
        %v2486 = vpop.f32.mrb[0].mxu0
        %v2487 = vadd.f32 0.0, %v2486
        %v2488 = vpop.f32.mrb[0].mxu0
        %2489 = vmatprep.mubr.f32.mxu0 0.0
        %2490 = vmatmul.mubr.f32.gmra.mrb[0].mxu0 %v2282
        %v2491 = vpop.f32.mrb[0].mxu0
        %v2492 = vadd.f32 0.0, %v2491
        %v2493 = vpop.f32.mrb[0].mxu0
        %2494 = vmatprep.mubr.f32.mxu0 0.0
        %2495 = vmatmul.mubr.f32.gmra.mrb[0].mxu0 %v2285
        %v2496 = vpop.f32.mrb[0].mxu0
        %v2497 = vadd.f32 0.0, %v2496
        %v2498 = vpop.f32.mrb[0].mxu0
        %2499 = vmatprep.mubr.f32.mxu0 0.0
        %2500 = vmatmul.mubr.f32.gmra.mrb[0].mxu0 %v2288
        %v2501 = vpop.f32.mrb[0].mxu0
        %v2502 = vadd.f32 0.0, %v2501
        %v2503 = vpop.f32.mrb[0].mxu0
        %2504 = vmatprep.mubr.f32.mxu0 0.0
        %2505 = vmatmul.mubr.f32.gmra.mrb[0].mxu0 %v2291
        %v2506 = vpop.f32.mrb[0].mxu0
        %v2507 = vadd.f32 0.0, %v2506
        %v2508 = vpop.f32.mrb[0].mxu0
        %2509 = vmatprep.mubr.f32.mxu0 0.0
        %2510 = vmatmul.mubr.f32.gmra.mrb[0].mxu0 %v2294
        %v2511 = vpop.f32.mrb[0].mxu0
        %v2512 = vadd.f32 0.0, %v2511
        %v2513 = vpop.f32.mrb[0].mxu0
        %2514 = vmatprep.mubr.f32.mxu0 0.0
        %2515 = vmatmul.mubr.f32.gmra.mrb[0].mxu0 %v2297
        %v2516 = vpop.f32.mrb[0].mxu0
        %v2517 = vadd.f32 0.0, %v2516
        %v2518 = vpop.f32.mrb[0].mxu0
        %2519 = vmatprep.mubr.f32.mxu0 0.0
        %2520 = vmatmul.mubr.f32.gmra.mrb[0].mxu0 %v2300
        %v2521 = vpop.f32.mrb[0].mxu0
        %v2522 = vadd.f32 0.0, %v2521
        %v2523 = vpop.f32.mrb[0].mxu0
        %2524 = vmatprep.mubr.f32.mxu0 0.0
        %2525 = vmatmul.mubr.f32.gmra.mrb[0].mxu0 %v2303
        %v2526 = vpop.f32.mrb[0].mxu0
        %v2527 = vadd.f32 0.0, %v2526
        %v2528 = vpop.f32.mrb[0].mxu0
        %2529 = vdwg.mxu0
        %2530 = vst.msk [vmem:[%s480] sm:$0xff] %vm527, %v2372
        %2531 = vst.msk [vmem:[%s480 + $0x8] sm:$0xff] %vm527, %v2377
        %2532 = vst.msk [vmem:[%s480 + $0x10] sm:$0xff] %vm527, %v2382
        %2533 = vst.msk [vmem:[%s480 + $0x18] sm:$0xff] %vm527, %v2387
        %2534 = vst.msk [vmem:[%s480 + $0x20] sm:$0xff] %vm527, %v2392
        %2535 = vst.msk [vmem:[%s480 + $0x28] sm:$0xff] %vm527, %v2397
        %2536 = vst.msk [vmem:[%s480 + $0x30] sm:$0xff] %vm527, %v2402
        %2537 = vst.msk [vmem:[%s480 + $0x38] sm:$0xff] %vm527, %v2407
        %2538 = vst.msk [vmem:[%s480 + $0x40] sm:$0xff] %vm527, %v2412
        %2539 = vst.msk [vmem:[%s480 + $0x48] sm:$0xff] %vm527, %v2417
        %2540 = vst.msk [vmem:[%s480 + $0x50] sm:$0xff] %vm527, %v2422
        %2541 = vst.msk [vmem:[%s480 + $0x58] sm:$0xff] %vm527, %v2427
        %2542 = vst.msk [vmem:[%s480 + $0x60] sm:$0xff] %vm527, %v2432
        %2543 = vst.msk [vmem:[%s480 + $0x68] sm:$0xff] %vm527, %v2437
        %2544 = vst.msk [vmem:[%s480 + $0x70] sm:$0xff] %vm527, %v2442
        %2545 = vst.msk [vmem:[%s480 + $0x78] sm:$0xff] %vm527, %v2447
        %2546 = vst.msk [vmem:[%s480 + $0x80] sm:$0xff] %vm527, %v2452
        %2547 = vst.msk [vmem:[%s480 + $0x88] sm:$0xff] %vm527, %v2457
        %2548 = vst.msk [vmem:[%s480 + $0x90] sm:$0xff] %vm527, %v2462
        %2549 = vst.msk [vmem:[%s480 + $0x98] sm:$0xff] %vm527, %v2467
        %2550 = vst.msk [vmem:[%s480 + $0xa0] sm:$0xff] %vm527, %v2472
        %2551 = vst.msk [vmem:[%s480 + $0xa8] sm:$0xff] %vm527, %v2477
        %2552 = vst.msk [vmem:[%s480 + $0xb0] sm:$0xff] %vm527, %v2482
        %2553 = vst.msk [vmem:[%s480 + $0xb8] sm:$0xff] %vm527, %v2487
        %2554 = vst.msk [vmem:[%s480 + $0xc0] sm:$0xff] %vm527, %v2492
        %2555 = vst.msk [vmem:[%s480 + $0xc8] sm:$0xff] %vm527, %v2497
        %2556 = vst.msk [vmem:[%s480 + $0xd0] sm:$0xff] %vm527, %v2502
        %2557 = vst.msk [vmem:[%s480 + $0xd8] sm:$0xff] %vm527, %v2507
        %2558 = vst.msk [vmem:[%s480 + $0xe0] sm:$0xff] %vm527, %v2512
        %2559 = vst.msk [vmem:[%s480 + $0xe8] sm:$0xff] %vm527, %v2517
        %2560 = vst.msk [vmem:[%s480 + $0xf0] sm:$0xff] %vm527, %v2522
        %2561 = vst.msk [vmem:[%s480 + $0xf8] sm:$0xff] %vm527, %v2527
        %v2562 = vsel %vm527, %v2372, 0.0
        %v2563 = vsel %vm527, %v2377, 0.0
        %v2564 = vadd.f32 %v2562, %v2563
        %v2565 = vsel %vm527, %v2382, 0.0
        %v2566 = vadd.f32 %v2564, %v2565
        %v2567 = vsel %vm527, %v2387, 0.0
        %v2568 = vadd.f32 %v2566, %v2567
        %v2569 = vsel %vm527, %v2392, 0.0
        %v2570 = vadd.f32 %v2568, %v2569
        %v2571 = vsel %vm527, %v2397, 0.0
        %v2572 = vadd.f32 %v2570, %v2571
        %v2573 = vsel %vm527, %v2402, 0.0
        %v2574 = vadd.f32 %v2572, %v2573
        %v2575 = vsel %vm527, %v2407, 0.0
        %v2576 = vadd.f32 %v2574, %v2575
        %v2577 = vsel %vm527, %v2412, 0.0
        %v2578 = vadd.f32 %v2576, %v2577
        %v2579 = vsel %vm527, %v2417, 0.0
        %v2580 = vadd.f32 %v2578, %v2579
        %v2581 = vsel %vm527, %v2422, 0.0
        %v2582 = vadd.f32 %v2580, %v2581
        %v2583 = vsel %vm527, %v2427, 0.0
        %v2584 = vadd.f32 %v2582, %v2583
        %v2585 = vsel %vm527, %v2432, 0.0
        %v2586 = vadd.f32 %v2584, %v2585
        %v2587 = vsel %vm527, %v2437, 0.0
        %v2588 = vadd.f32 %v2586, %v2587
        %v2589 = vsel %vm527, %v2442, 0.0
        %v2590 = vadd.f32 %v2588, %v2589
        %v2591 = vsel %vm527, %v2447, 0.0
        %v2592 = vadd.f32 %v2590, %v2591
        %v2593 = vsel %vm527, %v2452, 0.0
        %v2594 = vadd.f32 %v2592, %v2593
        %v2595 = vsel %vm527, %v2457, 0.0
        %v2596 = vadd.f32 %v2594, %v2595
        %v2597 = vsel %vm527, %v2462, 0.0
        %v2598 = vadd.f32 %v2596, %v2597
        %v2599 = vsel %vm527, %v2467, 0.0
        %v2600 = vadd.f32 %v2598, %v2599
        %v2601 = vsel %vm527, %v2472, 0.0
        %v2602 = vadd.f32 %v2600, %v2601
        %v2603 = vsel %vm527, %v2477, 0.0
        %v2604 = vadd.f32 %v2602, %v2603
        %v2605 = vsel %vm527, %v2482, 0.0
        %v2606 = vadd.f32 %v2604, %v2605
        %v2607 = vsel %vm527, %v2487, 0.0
        %v2608 = vadd.f32 %v2606, %v2607
        %v2609 = vsel %vm527, %v2492, 0.0
        %v2610 = vadd.f32 %v2608, %v2609
        %v2611 = vsel %vm527, %v2497, 0.0
        %v2612 = vadd.f32 %v2610, %v2611
        %v2613 = vsel %vm527, %v2502, 0.0
        %v2614 = vadd.f32 %v2612, %v2613
        %v2615 = vsel %vm527, %v2507, 0.0
        %v2616 = vadd.f32 %v2614, %v2615
        %v2617 = vsel %vm527, %v2512, 0.0
        %v2618 = vadd.f32 %v2616, %v2617
        %v2619 = vsel %vm527, %v2517, 0.0
        %v2620 = vadd.f32 %v2618, %v2619
        %v2621 = vsel %vm527, %v2522, 0.0
        %v2622 = vadd.f32 %v2620, %v2621
        %v2623 = vsel %vm527, %v2527, 0.0
        %v2624 = vadd.f32 %v2622, %v2623
        %v2625 = vrot.slane %v2624, 4
        %v2626 = vadd.f32 %v2624, %v2625
        %v2627 = vrot.slane %v2626, 2
        %v2628 = vadd.f32 %v2626, %v2627
        %v2629 = vrot.slane %v2628, 1
        %v2630 = vadd.f32 %v2628, %v2629
        %v2631 = vmul.f32 %v2372, %v2372
        %v2632 = vmul.f32 %v2377, %v2377
        %v2633 = vmul.f32 %v2382, %v2382
        %v2634 = vmul.f32 %v2387, %v2387
        %v2635 = vmul.f32 %v2392, %v2392
        %v2636 = vmul.f32 %v2397, %v2397
        %v2637 = vmul.f32 %v2402, %v2402
        %v2638 = vmul.f32 %v2407, %v2407
        %v2639 = vmul.f32 %v2412, %v2412
        %v2640 = vmul.f32 %v2417, %v2417
        %v2641 = vmul.f32 %v2422, %v2422
        %v2642 = vmul.f32 %v2427, %v2427
        %v2643 = vmul.f32 %v2432, %v2432
        %v2644 = vmul.f32 %v2437, %v2437
        %v2645 = vmul.f32 %v2442, %v2442
        %v2646 = vmul.f32 %v2447, %v2447
        %v2647 = vmul.f32 %v2452, %v2452
        %v2648 = vmul.f32 %v2457, %v2457
        %v2649 = vmul.f32 %v2462, %v2462
        %v2650 = vmul.f32 %v2467, %v2467
        %v2651 = vmul.f32 %v2472, %v2472
        %v2652 = vmul.f32 %v2477, %v2477
        %v2653 = vmul.f32 %v2482, %v2482
        %v2654 = vmul.f32 %v2487, %v2487
        %v2655 = vmul.f32 %v2492, %v2492
        %v2656 = vmul.f32 %v2497, %v2497
        %v2657 = vmul.f32 %v2502, %v2502
        %v2658 = vmul.f32 %v2507, %v2507
        %v2659 = vmul.f32 %v2512, %v2512
        %v2660 = vmul.f32 %v2517, %v2517
        %v2661 = vmul.f32 %v2522, %v2522
        %v2662 = vmul.f32 %v2527, %v2527
        %v2663 = vsel %vm527, %v2631, 0.0
        %v2664 = vsel %vm527, %v2632, 0.0
        %v2665 = vadd.f32 %v2663, %v2664
        %v2666 = vsel %vm527, %v2633, 0.0
        %v2667 = vadd.f32 %v2665, %v2666
        %v2668 = vsel %vm527, %v2634, 0.0
        %v2669 = vadd.f32 %v2667, %v2668
        %v2670 = vsel %vm527, %v2635, 0.0
        %v2671 = vadd.f32 %v2669, %v2670
        %v2672 = vsel %vm527, %v2636, 0.0
        %v2673 = vadd.f32 %v2671, %v2672
        %v2674 = vsel %vm527, %v2637, 0.0
        %v2675 = vadd.f32 %v2673, %v2674
        %v2676 = vsel %vm527, %v2638, 0.0
        %v2677 = vadd.f32 %v2675, %v2676
        %v2678 = vsel %vm527, %v2639, 0.0
        %v2679 = vadd.f32 %v2677, %v2678
        %v2680 = vsel %vm527, %v2640, 0.0
        %v2681 = vadd.f32 %v2679, %v2680
        %v2682 = vsel %vm527, %v2641, 0.0
        %v2683 = vadd.f32 %v2681, %v2682
        %v2684 = vsel %vm527, %v2642, 0.0
        %v2685 = vadd.f32 %v2683, %v2684
        %v2686 = vsel %vm527, %v2643, 0.0
        %v2687 = vadd.f32 %v2685, %v2686
        %v2688 = vsel %vm527, %v2644, 0.0
        %v2689 = vadd.f32 %v2687, %v2688
        %v2690 = vsel %vm527, %v2645, 0.0
        %v2691 = vadd.f32 %v2689, %v2690
        %v2692 = vsel %vm527, %v2646, 0.0
        %v2693 = vadd.f32 %v2691, %v2692
        %v2694 = vsel %vm527, %v2647, 0.0
        %v2695 = vadd.f32 %v2693, %v2694
        %v2696 = vsel %vm527, %v2648, 0.0
        %v2697 = vadd.f32 %v2695, %v2696
        %v2698 = vsel %vm527, %v2649, 0.0
        %v2699 = vadd.f32 %v2697, %v2698
        %v2700 = vsel %vm527, %v2650, 0.0
        %v2701 = vadd.f32 %v2699, %v2700
        %v2702 = vsel %vm527, %v2651, 0.0
        %v2703 = vadd.f32 %v2701, %v2702
        %v2704 = vsel %vm527, %v2652, 0.0
        %v2705 = vadd.f32 %v2703, %v2704
        %v2706 = vsel %vm527, %v2653, 0.0
        %v2707 = vadd.f32 %v2705, %v2706
        %v2708 = vsel %vm527, %v2654, 0.0
        %v2709 = vadd.f32 %v2707, %v2708
        %v2710 = vsel %vm527, %v2655, 0.0
        %v2711 = vadd.f32 %v2709, %v2710
        %v2712 = vsel %vm527, %v2656, 0.0
        %v2713 = vadd.f32 %v2711, %v2712
        %v2714 = vsel %vm527, %v2657, 0.0
        %v2715 = vadd.f32 %v2713, %v2714
        %v2716 = vsel %vm527, %v2658, 0.0
        %v2717 = vadd.f32 %v2715, %v2716
        %v2718 = vsel %vm527, %v2659, 0.0
        %v2719 = vadd.f32 %v2717, %v2718
        %v2720 = vsel %vm527, %v2660, 0.0
        %v2721 = vadd.f32 %v2719, %v2720
        %v2722 = vsel %vm527, %v2661, 0.0
        %v2723 = vadd.f32 %v2721, %v2722
        %v2724 = vsel %vm527, %v2662, 0.0
        %v2725 = vadd.f32 %v2723, %v2724
        %v2726 = vrot.slane %v2725, 4
        %v2727 = vadd.f32 %v2725, %v2726
        %v2728 = vrot.slane %v2727, 2
        %v2729 = vadd.f32 %v2727, %v2728
        %v2730 = vrot.slane %v2729, 1
        %v2731 = vadd.f32 %v2729, %v2730
        %vm2732 = vcmask 1040384
        %v2733 = vsel %vm2732, %v2630, %v2731
        %2734 = vst.msk [vmem:[%s419] sm:$0x3] %vm482, %v2733
        %s2735 = smul.u32 32, %s27
        %p2736 = scmp.lt.s32.totalorder %s26, 1
        %s2737 = scalar_select %p2736, %s26, 1
        %p2738 = scmp.lt.s32.totalorder %s2735, 31
        %s2739 = scalar_select %p2738, %s2735, 31
        %s2740 = smul.addr %s2737, 32
        %s2741 = sadd.s32 %s2739, %s2740
        %s2742 = smul.addr %s2741, 8
        %s2743 = scalar_lea.vmem %s6, %s2742
        %s2744 = sand.u32 %s240, 1
        %s2745 = scalar_lea.sflag [#allocation4], %s2744
        %s2746 = sand.u32 %s240, 1
        %s2747 = smul.addr %s2746, 2
        %s2748 = scalar_lea.vmem [#allocation3], %s2747
        // Predicated region
        $region49: #{tpu_custom_call.1} parent=43 // pred_check
          %p2749 = pneg %p222
        $region50: #{tpu_custom_call.1} parent=43 // pred_check_branch
          %2751 = sbr.rel (%p2749) target = $region52
        $region51: #{tpu_custom_call.1} parent=43 // pred_region
          %s2752 = smul.u32 32, %s27
        $region52: #{tpu_custom_call.1} parent=43 // pred_fallthru
          _
        // Predicated region
        $region53: #{tpu_custom_call.1} parent=43 // pred_check
          %p2753 = pneg %p250
        $region54: #{tpu_custom_call.1} parent=43 // pred_check_branch
          %2755 = sbr.rel (%p2753) target = $region56
        $region55: #{tpu_custom_call.1} parent=43 // pred_region
          %s2757 = ssub.s32 32, 32
          %2758 = vsyncadd %s2745, %s2757
          %s2759 = sadd.s32 %s27, %s26
          %s2760 = smul.addr %s2759, 32
          %s2761 = scalar_lea.hbm %s7, %s2760
          %s2763 = sshll.u32 %s2748, 4
          %s2764 = int_to_ptr.vmem [resolvable:$true] %s2763
          %2766 = dma.vmem_to_hbm [thread:$0]  %s2764, 32, %s2761, %s2745
        $region56: #{tpu_custom_call.1} parent=43 // pred_fallthru
          _
      $region44: #{tpu_custom_call.1} parent=5 // pred_fallthru
        _
      %p2767 = scmp.le.s32.totalorder 2, %s17
      // Predicated region
      $region57: #{tpu_custom_call.1} parent=5 // pred_check
        %p2768 = pneg %p2767
      $region58: #{tpu_custom_call.1} parent=5 // pred_check_branch
        %2770 = sbr.rel (%p2768) target = $region60
      $region59: #{tpu_custom_call.1} parent=5 // pred_region
        %s2771 = ssub.s32 %s17, 2
        // Predicated region
        $region61: #{tpu_custom_call.1} parent=59 // pred_check
          %p2772 = pneg %p228
        $region62: #{tpu_custom_call.1} parent=59 // pred_check_branch
          %2774 = sbr.rel (%p2772) target = $region64
        $region63: #{tpu_custom_call.1} parent=59 // pred_region
          %s2775 = smul.u32 32, %s29
          %p2776 = scmp.lt.s32.totalorder %s28, 1
          %s2777 = scalar_select %p2776, %s28, 1
          %p2778 = scmp.lt.s32.totalorder %s2775, 31
          %s2779 = scalar_select %p2778, %s2775, 31
          %s2780 = smul.addr %s2777, 32
          %s2781 = sadd.s32 %s2779, %s2780
          %s2782 = smul.addr %s2781, 8
          %s2783 = scalar_lea.vmem %s6, %s2782
        $region64: #{tpu_custom_call.1} parent=59 // pred_fallthru
          _
        // Predicated region
        $region65: #{tpu_custom_call.1} parent=59 // pred_check
          %p2784 = pneg %p256
        $region66: #{tpu_custom_call.1} parent=59 // pred_check_branch
          %2786 = sbr.rel (%p2784) target = $region68
        $region67: #{tpu_custom_call.1} parent=59 // pred_region
          %s2787 = sand.u32 %s241, 1
          %s2788 = scalar_lea.sflag [#allocation4], %s2787
          %s2789 = sand.u32 %s241, 1
          %s2790 = smul.addr %s2789, 2
          %s2791 = scalar_lea.vmem [#allocation3], %s2790
          %2792 = dma.done %s2788, 32
        $region68: #{tpu_custom_call.1} parent=59 // pred_fallthru
          _
      $region60: #{tpu_custom_call.1} parent=5 // pred_fallthru
        _
    $region6: #{tpu_custom_call.1} parent=1 // loop_footer
      %s21 = sadd.s32 1, %s17
    $region7: #{tpu_custom_call.1} parent=1 // loop_footer_branch
      %16 = sbr.rel target = $region3
    $region8: #{tpu_custom_call.1} parent=1 // loop_exit
      _
    %2793 = vsyncpa [#allocation4], 1
    %s2794 = scalar_lea.sflag [#allocation4], 1
    %2795 = vsyncpa %s2794, 1

</llo_original>
